<compile_context>
chip_gen: v7x
topology: tpu7x:2x2x1
jax: 0.10.0
libtpu: 0.0.40
codegen_flags: <defaults>
</compile_context>

<pallas_src>
import jax
import jax.numpy as jnp
from jax.experimental import pallas as pl
from jax.experimental.pallas import tpu as pltpu


C_BRANCH = 192                 # channels per concatenated branch
N_BRANCH = 4                   # number of branches
C_IN = N_BRANCH * C_BRANCH     # 768
C_OUT = 192


def cat_conv1x1_kernel(x1_ref, x2_ref, x3_ref, x4_ref, w_ref, o_ref, xcat_ref):
    # x*_ref: (192, cols) bf16 branch activations; w_ref: (192, 768) bf16;
    # o_ref: (192, cols) f32; xcat_ref: (768, cols) bf16 VMEM scratch.
    #
    # Fused channel-concat: copy the four bf16 branches into one contiguous
    # slab (sublane-dim slices; 192 % 16 == 0, so bf16 packing is aligned).
    xcat_ref[0 * C_BRANCH:1 * C_BRANCH, :] = x1_ref[...]
    xcat_ref[1 * C_BRANCH:2 * C_BRANCH, :] = x2_ref[...]
    xcat_ref[2 * C_BRANCH:3 * C_BRANCH, :] = x3_ref[...]
    xcat_ref[3 * C_BRANCH:4 * C_BRANCH, :] = x4_ref[...]
    # Single K=768 MXU contraction, f32 accumulate, f32 store.
    o_ref[...] = jnp.dot(w_ref[...], xcat_ref[...],
                         preferred_element_type=jnp.float32).astype(o_ref.dtype)


def prepare_weight(weight):
    """PyTorch OIHW [192, 768, 1, 1] -> (C_out, C_in) bf16.

    Pure reshape (no transpose); call once at init so no per-invocation
    weight relayout is emitted.
    """
    return jnp.asarray(weight).reshape(C_OUT, C_IN).astype(jnp.bfloat16)


def _to_c_major(x):
    """NCHW -> (C, N*H*W).  Pure reshape for N == 1; transpose only if N > 1."""
    N, C, H, W = x.shape
    if N == 1:
        return x.reshape(C, H * W)
    return jnp.transpose(x.reshape(N, C, H * W), (1, 0, 2)).reshape(C, N * H * W)


def _from_c_major(y, N, H, W):
    """(C_out, N*H*W) -> NCHW.  Pure reshape for N == 1."""
    if N == 1:
        return y.reshape(1, C_OUT, H, W)
    return jnp.transpose(y.reshape(C_OUT, N, H * W), (1, 0, 2)).reshape(N, C_OUT, H, W)


@jax.jit
def cat_conv2d(x148, x157, x172, x176, w2d):
    """4x NCHW [N,192,H,W] activations + prepared (192,768) bf16 weight -> [N,192,H,W] f32."""
    N, C, H, W = x148.shape
    assert C == C_BRANCH
    cols = N * H * W

    # Producers should emit bf16 directly; the cast here stands in for that
    # (it is a no-op if the inputs are already bf16).
    xs = [_to_c_major(x.astype(jnp.bfloat16)) for x in (x148, x157, x172, x176)]

    # Accurate tiny cost so XLA overlaps this launch-bound node with neighbors.
    cost = pl.CostEstimate(
        flops=2 * C_OUT * C_IN * cols,
        transcendentals=0,
        bytes_accessed=(N_BRANCH * C_BRANCH * cols * 2   # bf16 activations
                        + C_OUT * C_IN * 2                # bf16 weight
                        + C_OUT * cols * 4))              # f32 output

    out2d = pl.pallas_call(
        cat_conv1x1_kernel,
        out_shape=jax.ShapeDtypeStruct((C_OUT, cols), jnp.float32),
        grid=(1,),
        in_specs=[pl.BlockSpec((C_BRANCH, cols), lambda i: (0, 0)) for _ in range(4)]
                 + [pl.BlockSpec((C_OUT, C_IN), lambda i: (0, 0))],
        out_specs=pl.BlockSpec((C_OUT, cols), lambda i: (0, 0)),
        scratch_shapes=[pltpu.VMEM((C_IN, cols), jnp.bfloat16)],
        compiler_params=pltpu.CompilerParams(
            dimension_semantics=("arbitrary",)),
        cost_estimate=cost,
    )(*xs, w2d)

    return _from_c_major(out2d, N, H, W)


if __name__ == "__main__":
    key = jax.random.PRNGKey(0)
    k1, k2, k3, k4, kw = jax.random.split(key, 5)

    # Shapes consistent with the module: 4 x [1, 192, 12, 12] inputs.
    shape = (1, C_BRANCH, 12, 12)
    x148 = jax.random.normal(k1, shape, dtype=jnp.float32)
    x157 = jax.random.normal(k2, shape, dtype=jnp.float32)
    x172 = jax.random.normal(k3, shape, dtype=jnp.float32)
    x176 = jax.random.normal(k4, shape, dtype=jnp.float32)

    # Deterministic weight init for Conv2d(768, 192, 1, bias=False): OIHW.
    weight = jax.random.normal(kw, (C_OUT, C_IN, 1, 1), dtype=jnp.float32)
    weight = weight * (1.0 / jnp.sqrt(C_IN))

    # One-time weight layout prep (static; outside the per-call path).
    w2d = prepare_weight(weight)

    out = cat_conv2d(x148, x157, x172, x176, w2d)
    out = jax.block_until_ready(out)

    # Pure-JAX f32 reference: concat + 1x1 conv as einsum.
    x_cat = jnp.concatenate([x148, x157, x172, x176], axis=1)  # [1, 768, 12, 12]
    ref = jnp.einsum("ncHW,oc->noHW", x_cat, weight[:, :, 0, 0])
    assert out.shape == (1, C_OUT, 12, 12)
    # bf16 operands with f32 accumulation -> slightly looser tolerance than pure f32.
    assert jnp.allclose(out, ref, atol=5e-2, rtol=2e-2), \
        float(jnp.max(jnp.abs(out - ref)))

    print("KERNEL_OK")
</pallas_src>

<mosaic_0001>
module attributes {stable_mosaic.version = 11 : i64} {
  func.func @cat_conv1x1_kernel(%arg0: i32, %arg1: memref<192x144xbf16, #tpu.memory_space<vmem>>, %arg2: memref<192x144xbf16, #tpu.memory_space<vmem>>, %arg3: memref<192x144xbf16, #tpu.memory_space<vmem>>, %arg4: memref<192x144xbf16, #tpu.memory_space<vmem>>, %arg5: memref<192x768xbf16, #tpu.memory_space<vmem>>, %arg6: memref<192x144xf32, #tpu.memory_space<vmem>>, %arg7: memref<768x144xbf16, #tpu.memory_space<vmem>>) attributes {dimension_semantics = [#tpu.dimension_semantics<arbitrary>], iteration_bounds = array<i64: 1>, scalar_prefetch = 0 : i64, scratch_operands = 1 : i64, tpu.core_type = #tpu.core_type<tc>, window_params = [{pipeline_mode = #tpu.pipeline_mode<synchronous>, transform_indices = @transform_0, window_bounds = array<i64: 192, 144>}, {pipeline_mode = #tpu.pipeline_mode<synchronous>, transform_indices = @transform_1, window_bounds = array<i64: 192, 144>}, {pipeline_mode = #tpu.pipeline_mode<synchronous>, transform_indices = @transform_2, window_bounds = array<i64: 192, 144>}, {pipeline_mode = #tpu.pipeline_mode<synchronous>, transform_indices = @transform_3, window_bounds = array<i64: 192, 144>}, {pipeline_mode = #tpu.pipeline_mode<synchronous>, transform_indices = @transform_4, window_bounds = array<i64: 192, 768>}, {pipeline_mode = #tpu.pipeline_mode<synchronous>, transform_indices = @transform_5, window_bounds = array<i64: 192, 144>}]} {
    %c0 = arith.constant 0 : index
    %c0_0 = arith.constant 0 : index
    %0 = vector.load %arg1[%c0, %c0_0] : memref<192x144xbf16, #tpu.memory_space<vmem>>, vector<192x144xbf16>
    %c0_1 = arith.constant 0 : index
    %c0_2 = arith.constant 0 : index
    %1 = vector.load %arg7[%c0_1, %c0_2] : memref<768x144xbf16, #tpu.memory_space<vmem>>, vector<192x144xbf16>
    tpu.vector_store %arg7[%c0_1, %c0_2], %0 {strides = array<i32>} : memref<768x144xbf16, #tpu.memory_space<vmem>>, vector<192x144xbf16>,
    %c0_3 = arith.constant 0 : index
    %c0_4 = arith.constant 0 : index
    %2 = vector.load %arg2[%c0_3, %c0_4] : memref<192x144xbf16, #tpu.memory_space<vmem>>, vector<192x144xbf16>
    %c192 = arith.constant 192 : index
    %c0_5 = arith.constant 0 : index
    %3 = vector.load %arg7[%c192, %c0_5] : memref<768x144xbf16, #tpu.memory_space<vmem>>, vector<192x144xbf16>
    tpu.vector_store %arg7[%c192, %c0_5], %2 {strides = array<i32>} : memref<768x144xbf16, #tpu.memory_space<vmem>>, vector<192x144xbf16>,
    %c0_6 = arith.constant 0 : index
    %c0_7 = arith.constant 0 : index
    %4 = vector.load %arg3[%c0_6, %c0_7] : memref<192x144xbf16, #tpu.memory_space<vmem>>, vector<192x144xbf16>
    %c384 = arith.constant 384 : index
    %c0_8 = arith.constant 0 : index
    %5 = vector.load %arg7[%c384, %c0_8] : memref<768x144xbf16, #tpu.memory_space<vmem>>, vector<192x144xbf16>
    tpu.vector_store %arg7[%c384, %c0_8], %4 {strides = array<i32>} : memref<768x144xbf16, #tpu.memory_space<vmem>>, vector<192x144xbf16>,
    %c0_9 = arith.constant 0 : index
    %c0_10 = arith.constant 0 : index
    %6 = vector.load %arg4[%c0_9, %c0_10] : memref<192x144xbf16, #tpu.memory_space<vmem>>, vector<192x144xbf16>
    %c576 = arith.constant 576 : index
    %c0_11 = arith.constant 0 : index
    %7 = vector.load %arg7[%c576, %c0_11] : memref<768x144xbf16, #tpu.memory_space<vmem>>, vector<192x144xbf16>
    tpu.vector_store %arg7[%c576, %c0_11], %6 {strides = array<i32>} : memref<768x144xbf16, #tpu.memory_space<vmem>>, vector<192x144xbf16>,
    %c0_12 = arith.constant 0 : index
    %c0_13 = arith.constant 0 : index
    %8 = vector.load %arg5[%c0_12, %c0_13] : memref<192x768xbf16, #tpu.memory_space<vmem>>, vector<192x768xbf16>
    %c0_14 = arith.constant 0 : index
    %c0_15 = arith.constant 0 : index
    %9 = vector.load %arg7[%c0_14, %c0_15] : memref<768x144xbf16, #tpu.memory_space<vmem>>, vector<768x144xbf16>
    %cst = arith.constant dense<0.000000e+00> : vector<192x144xf32>
    %10 = tpu.matmul %8, %9, %cst {dimension_numbers = #tpu.dot_dimension_numbers<[1], [0], [0], [1], [0, 0, 1, 1], [], []>} : vector<192x768xbf16>, vector<768x144xbf16>, vector<192x144xf32> -> vector<192x144xf32>
    %c0_16 = arith.constant 0 : index
    %c0_17 = arith.constant 0 : index
    %11 = vector.load %arg6[%c0_16, %c0_17] : memref<192x144xf32, #tpu.memory_space<vmem>>, vector<192x144xf32>
    tpu.vector_store %arg6[%c0_16, %c0_17], %10 {strides = array<i32>} : memref<192x144xf32, #tpu.memory_space<vmem>>, vector<192x144xf32>,
    return
  }
  func.func @transform_0(%arg0: i32) -> (i32, i32) {
    %c0_i32 = arith.constant 0 : i32
    %c0_i32_0 = arith.constant 0 : i32
    %c0_i32_1 = arith.constant 0 : i32
    return %c0_i32, %c0_i32_0 : i32, i32
  }
  func.func @transform_1(%arg0: i32) -> (i32, i32) {
    %c0_i32 = arith.constant 0 : i32
    %c0_i32_0 = arith.constant 0 : i32
    %c0_i32_1 = arith.constant 0 : i32
    return %c0_i32, %c0_i32_0 : i32, i32
  }
  func.func @transform_2(%arg0: i32) -> (i32, i32) {
    %c0_i32 = arith.constant 0 : i32
    %c0_i32_0 = arith.constant 0 : i32
    %c0_i32_1 = arith.constant 0 : i32
    return %c0_i32, %c0_i32_0 : i32, i32
  }
  func.func @transform_3(%arg0: i32) -> (i32, i32) {
    %c0_i32 = arith.constant 0 : i32
    %c0_i32_0 = arith.constant 0 : i32
    %c0_i32_1 = arith.constant 0 : i32
    return %c0_i32, %c0_i32_0 : i32, i32
  }
  func.func @transform_4(%arg0: i32) -> (i32, i32) {
    %c0_i32 = arith.constant 0 : i32
    %c0_i32_0 = arith.constant 0 : i32
    %c0_i32_1 = arith.constant 0 : i32
    return %c0_i32, %c0_i32_0 : i32, i32
  }
  func.func @transform_5(%arg0: i32) -> (i32, i32) {
    %c0_i32 = arith.constant 0 : i32
    %c0_i32_0 = arith.constant 0 : i32
    %c0_i32_1 = arith.constant 0 : i32
    return %c0_i32, %c0_i32_0 : i32, i32
  }
}

</mosaic_0001>

<llo_original>
// kernel: cat_conv2d.1
$region0: #{cat_conv2d.1}
  #allocation0 [shape = 'u32[]', space=smem, size = 0x4, offset = 0x4, fixed_abs, tag = 'smem constant byte address 0x4 - core index']
  #allocation1 [shape = 'u32[144,128]{1,0:T(1,128)}', space=vmem, size = 0x12000, scoped, tag = 'internal scratch']
  #allocation2 [shape = 'bf16[768,144]{1,0:T(16,128)(2,1)}', space=vmem, size = 0x60000, scoped, tag = 'scratch operand']
  %s0 = inlined_call_operand.vmem [shape: bf16[192,144], index: 0, kind: input, shape index: {}]
  %s1 = inlined_call_operand.vmem [shape: bf16[192,144], index: 1, kind: input, shape index: {}]
  %s2 = inlined_call_operand.vmem [shape: bf16[192,144], index: 2, kind: input, shape index: {}]
  %s3 = inlined_call_operand.vmem [shape: bf16[192,144], index: 3, kind: input, shape index: {}]
  %s4 = inlined_call_operand.vmem [shape: bf16[192,768], index: 4, kind: input, shape index: {}]
  %s5 = inlined_call_operand.vmem [shape: f32[192,144], index: 5, kind: output, shape index: {}]
  %s6 = sld [smem:[#allocation0]]
  $region30: #{cat_conv2d.1} parent=0
    _
  %s8 = ssub.s32 1, %s6
  %s9 = scalar_select 0, %s8, %s6
  // Predicated region
  $region2: #{cat_conv2d.1} parent=0 // pred_check
    _
  $region3: #{cat_conv2d.1} parent=0 // pred_check_branch
    %11 = sbr.rel (0) target = $region5
  $region4: #{cat_conv2d.1} parent=0 // pred_region
    _
  $region5: #{cat_conv2d.1} parent=0 // pred_fallthru
    _
  // Predicated region
  $region6: #{cat_conv2d.1} parent=0 // pred_check
    _
  $region7: #{cat_conv2d.1} parent=0 // pred_check_branch
    %13 = sbr.rel (0) target = $region9
  $region8: #{cat_conv2d.1} parent=0 // pred_region
    _
  $region9: #{cat_conv2d.1} parent=0 // pred_fallthru
    _
  // Predicated region
  $region10: #{cat_conv2d.1} parent=0 // pred_check
    _
  $region11: #{cat_conv2d.1} parent=0 // pred_check_branch
    %15 = sbr.rel (0) target = $region13
  $region12: #{cat_conv2d.1} parent=0 // pred_region
    _
  $region13: #{cat_conv2d.1} parent=0 // pred_fallthru
    _
  // Predicated region
  $region14: #{cat_conv2d.1} parent=0 // pred_check
    _
  $region15: #{cat_conv2d.1} parent=0 // pred_check_branch
    %17 = sbr.rel (0) target = $region17
  $region16: #{cat_conv2d.1} parent=0 // pred_region
    _
  $region17: #{cat_conv2d.1} parent=0 // pred_fallthru
    _
  // Predicated region
  $region18: #{cat_conv2d.1} parent=0 // pred_check
    _
  $region19: #{cat_conv2d.1} parent=0 // pred_check_branch
    %19 = sbr.rel (0) target = $region21
  $region20: #{cat_conv2d.1} parent=0 // pred_region
    _
  $region21: #{cat_conv2d.1} parent=0 // pred_fallthru
    _
  %v20 = vld [vmem:[%s0] sm:$0xff]
  %v21 = vld [vmem:[%s0 + $0x8] sm:$0xff]
  %v22 = vld [vmem:[%s0 + $0x10] sm:$0xff]
  %v23 = vld [vmem:[%s0 + $0x18] sm:$0xff]
  %v24 = vld [vmem:[%s0 + $0x20] sm:$0xff]
  %v25 = vld [vmem:[%s0 + $0x28] sm:$0xff]
  %v26 = vld [vmem:[%s0 + $0x30] sm:$0xff]
  %v27 = vld [vmem:[%s0 + $0x38] sm:$0xff]
  %v28 = vld [vmem:[%s0 + $0x40] sm:$0xff]
  %v29 = vld [vmem:[%s0 + $0x48] sm:$0xff]
  %v30 = vld [vmem:[%s0 + $0x50] sm:$0xff]
  %v31 = vld [vmem:[%s0 + $0x58] sm:$0xff]
  %v32 = vld [vmem:[%s0 + $0x60] sm:$0xff]
  %v33 = vld [vmem:[%s0 + $0x68] sm:$0xff]
  %v34 = vld [vmem:[%s0 + $0x70] sm:$0xff]
  %v35 = vld [vmem:[%s0 + $0x78] sm:$0xff]
  %v36 = vld [vmem:[%s0 + $0x80] sm:$0xff]
  %v37 = vld [vmem:[%s0 + $0x88] sm:$0xff]
  %v38 = vld [vmem:[%s0 + $0x90] sm:$0xff]
  %v39 = vld [vmem:[%s0 + $0x98] sm:$0xff]
  %v40 = vld [vmem:[%s0 + $0xa0] sm:$0xff]
  %v41 = vld [vmem:[%s0 + $0xa8] sm:$0xff]
  %v42 = vld [vmem:[%s0 + $0xb0] sm:$0xff]
  %v43 = vld [vmem:[%s0 + $0xb8] sm:$0xff]
  %v68 = vunpack.c.l.b16 %v20
  %v69 = vunpack.c.h.b16 %v20
  %v70 = vunpack.c.l.b16 %v21
  %v71 = vunpack.c.h.b16 %v21
  %v72 = vunpack.c.l.b16 %v22
  %v73 = vunpack.c.h.b16 %v22
  %v74 = vunpack.c.l.b16 %v23
  %v75 = vunpack.c.h.b16 %v23
  %v76 = vunpack.c.l.b16 %v24
  %v77 = vunpack.c.h.b16 %v24
  %v78 = vunpack.c.l.b16 %v25
  %v79 = vunpack.c.h.b16 %v25
  %v80 = vunpack.c.l.b16 %v26
  %v81 = vunpack.c.h.b16 %v26
  %v82 = vunpack.c.l.b16 %v27
  %v83 = vunpack.c.h.b16 %v27
  %v84 = vunpack.c.l.b16 %v28
  %v85 = vunpack.c.h.b16 %v28
  %v86 = vunpack.c.l.b16 %v29
  %v87 = vunpack.c.h.b16 %v29
  %v88 = vunpack.c.l.b16 %v30
  %v89 = vunpack.c.h.b16 %v30
  %v90 = vunpack.c.l.b16 %v31
  %v91 = vunpack.c.h.b16 %v31
  %v92 = vunpack.c.l.b16 %v32
  %v93 = vunpack.c.h.b16 %v32
  %v94 = vunpack.c.l.b16 %v33
  %v95 = vunpack.c.h.b16 %v33
  %v96 = vunpack.c.l.b16 %v34
  %v97 = vunpack.c.h.b16 %v34
  %v98 = vunpack.c.l.b16 %v35
  %v99 = vunpack.c.h.b16 %v35
  %v100 = vunpack.c.l.b16 %v36
  %v101 = vunpack.c.h.b16 %v36
  %v102 = vunpack.c.l.b16 %v37
  %v103 = vunpack.c.h.b16 %v37
  %v104 = vunpack.c.l.b16 %v38
  %v105 = vunpack.c.h.b16 %v38
  %v106 = vunpack.c.l.b16 %v39
  %v107 = vunpack.c.h.b16 %v39
  %v108 = vunpack.c.l.b16 %v40
  %v109 = vunpack.c.h.b16 %v40
  %v110 = vunpack.c.l.b16 %v41
  %v111 = vunpack.c.h.b16 %v41
  %v112 = vunpack.c.l.b16 %v42
  %v113 = vunpack.c.h.b16 %v42
  %v114 = vunpack.c.l.b16 %v43
  %v115 = vunpack.c.h.b16 %v43
  %v116 = vpack.c.b16 %v70, %v68
  %v117 = vpack.c.b16 %v71, %v69
  %v118 = vpack.c.b16 %v74, %v72
  %v119 = vpack.c.b16 %v75, %v73
  %v120 = vpack.c.b16 %v78, %v76
  %v121 = vpack.c.b16 %v79, %v77
  %v122 = vpack.c.b16 %v82, %v80
  %v123 = vpack.c.b16 %v83, %v81
  %v124 = vpack.c.b16 %v86, %v84
  %v125 = vpack.c.b16 %v87, %v85
  %v126 = vpack.c.b16 %v90, %v88
  %v127 = vpack.c.b16 %v91, %v89
  %v128 = vpack.c.b16 %v94, %v92
  %v129 = vpack.c.b16 %v95, %v93
  %v130 = vpack.c.b16 %v98, %v96
  %v131 = vpack.c.b16 %v99, %v97
  %v132 = vpack.c.b16 %v102, %v100
  %v133 = vpack.c.b16 %v103, %v101
  %v134 = vpack.c.b16 %v106, %v104
  %v135 = vpack.c.b16 %v107, %v105
  %v136 = vpack.c.b16 %v110, %v108
  %v137 = vpack.c.b16 %v111, %v109
  %v138 = vpack.c.b16 %v114, %v112
  %v139 = vpack.c.b16 %v115, %v113
  %164 = vst [vmem:[#allocation2] sm:$0xff] %v116
  %vm165 = vcmask 130048
  %166 = vst.msk [vmem:[#allocation2 + $0x8] sm:$0xff] %vm165, %v117
  %167 = vst [vmem:[#allocation2 + $0x10] sm:$0xff] %v118
  %168 = vst.msk [vmem:[#allocation2 + $0x18] sm:$0xff] %vm165, %v119
  %169 = vst [vmem:[#allocation2 + $0x20] sm:$0xff] %v120
  %170 = vst.msk [vmem:[#allocation2 + $0x28] sm:$0xff] %vm165, %v121
  %171 = vst [vmem:[#allocation2 + $0x30] sm:$0xff] %v122
  %172 = vst.msk [vmem:[#allocation2 + $0x38] sm:$0xff] %vm165, %v123
  %173 = vst [vmem:[#allocation2 + $0x40] sm:$0xff] %v124
  %174 = vst.msk [vmem:[#allocation2 + $0x48] sm:$0xff] %vm165, %v125
  %175 = vst [vmem:[#allocation2 + $0x50] sm:$0xff] %v126
  %176 = vst.msk [vmem:[#allocation2 + $0x58] sm:$0xff] %vm165, %v127
  %177 = vst [vmem:[#allocation2 + $0x60] sm:$0xff] %v128
  %178 = vst.msk [vmem:[#allocation2 + $0x68] sm:$0xff] %vm165, %v129
  %179 = vst [vmem:[#allocation2 + $0x70] sm:$0xff] %v130
  %180 = vst.msk [vmem:[#allocation2 + $0x78] sm:$0xff] %vm165, %v131
  %181 = vst [vmem:[#allocation2 + $0x80] sm:$0xff] %v132
  %182 = vst.msk [vmem:[#allocation2 + $0x88] sm:$0xff] %vm165, %v133
  %183 = vst [vmem:[#allocation2 + $0x90] sm:$0xff] %v134
  %184 = vst.msk [vmem:[#allocation2 + $0x98] sm:$0xff] %vm165, %v135
  %185 = vst [vmem:[#allocation2 + $0xa0] sm:$0xff] %v136
  %186 = vst.msk [vmem:[#allocation2 + $0xa8] sm:$0xff] %vm165, %v137
  %187 = vst [vmem:[#allocation2 + $0xb0] sm:$0xff] %v138
  %188 = vst.msk [vmem:[#allocation2 + $0xb8] sm:$0xff] %vm165, %v139
  %v189 = vld [vmem:[%s1] sm:$0xff]
  %v190 = vld [vmem:[%s1 + $0x8] sm:$0xff]
  %v191 = vld [vmem:[%s1 + $0x10] sm:$0xff]
  %v192 = vld [vmem:[%s1 + $0x18] sm:$0xff]
  %v193 = vld [vmem:[%s1 + $0x20] sm:$0xff]
  %v194 = vld [vmem:[%s1 + $0x28] sm:$0xff]
  %v195 = vld [vmem:[%s1 + $0x30] sm:$0xff]
  %v196 = vld [vmem:[%s1 + $0x38] sm:$0xff]
  %v197 = vld [vmem:[%s1 + $0x40] sm:$0xff]
  %v198 = vld [vmem:[%s1 + $0x48] sm:$0xff]
  %v199 = vld [vmem:[%s1 + $0x50] sm:$0xff]
  %v200 = vld [vmem:[%s1 + $0x58] sm:$0xff]
  %v201 = vld [vmem:[%s1 + $0x60] sm:$0xff]
  %v202 = vld [vmem:[%s1 + $0x68] sm:$0xff]
  %v203 = vld [vmem:[%s1 + $0x70] sm:$0xff]
  %v204 = vld [vmem:[%s1 + $0x78] sm:$0xff]
  %v205 = vld [vmem:[%s1 + $0x80] sm:$0xff]
  %v206 = vld [vmem:[%s1 + $0x88] sm:$0xff]
  %v207 = vld [vmem:[%s1 + $0x90] sm:$0xff]
  %v208 = vld [vmem:[%s1 + $0x98] sm:$0xff]
  %v209 = vld [vmem:[%s1 + $0xa0] sm:$0xff]
  %v210 = vld [vmem:[%s1 + $0xa8] sm:$0xff]
  %v211 = vld [vmem:[%s1 + $0xb0] sm:$0xff]
  %v212 = vld [vmem:[%s1 + $0xb8] sm:$0xff]
  %v237 = vunpack.c.l.b16 %v189
  %v238 = vunpack.c.h.b16 %v189
  %v239 = vunpack.c.l.b16 %v190
  %v240 = vunpack.c.h.b16 %v190
  %v241 = vunpack.c.l.b16 %v191
  %v242 = vunpack.c.h.b16 %v191
  %v243 = vunpack.c.l.b16 %v192
  %v244 = vunpack.c.h.b16 %v192
  %v245 = vunpack.c.l.b16 %v193
  %v246 = vunpack.c.h.b16 %v193
  %v247 = vunpack.c.l.b16 %v194
  %v248 = vunpack.c.h.b16 %v194
  %v249 = vunpack.c.l.b16 %v195
  %v250 = vunpack.c.h.b16 %v195
  %v251 = vunpack.c.l.b16 %v196
  %v252 = vunpack.c.h.b16 %v196
  %v253 = vunpack.c.l.b16 %v197
  %v254 = vunpack.c.h.b16 %v197
  %v255 = vunpack.c.l.b16 %v198
  %v256 = vunpack.c.h.b16 %v198
  %v257 = vunpack.c.l.b16 %v199
  %v258 = vunpack.c.h.b16 %v199
  %v259 = vunpack.c.l.b16 %v200
  %v260 = vunpack.c.h.b16 %v200
  %v261 = vunpack.c.l.b16 %v201
  %v262 = vunpack.c.h.b16 %v201
  %v263 = vunpack.c.l.b16 %v202
  %v264 = vunpack.c.h.b16 %v202
  %v265 = vunpack.c.l.b16 %v203
  %v266 = vunpack.c.h.b16 %v203
  %v267 = vunpack.c.l.b16 %v204
  %v268 = vunpack.c.h.b16 %v204
  %v269 = vunpack.c.l.b16 %v205
  %v270 = vunpack.c.h.b16 %v205
  %v271 = vunpack.c.l.b16 %v206
  %v272 = vunpack.c.h.b16 %v206
  %v273 = vunpack.c.l.b16 %v207
  %v274 = vunpack.c.h.b16 %v207
  %v275 = vunpack.c.l.b16 %v208
  %v276 = vunpack.c.h.b16 %v208
  %v277 = vunpack.c.l.b16 %v209
  %v278 = vunpack.c.h.b16 %v209
  %v279 = vunpack.c.l.b16 %v210
  %v280 = vunpack.c.h.b16 %v210
  %v281 = vunpack.c.l.b16 %v211
  %v282 = vunpack.c.h.b16 %v211
  %v283 = vunpack.c.l.b16 %v212
  %v284 = vunpack.c.h.b16 %v212
  %v285 = vpack.c.b16 %v239, %v237
  %v286 = vpack.c.b16 %v240, %v238
  %v287 = vpack.c.b16 %v243, %v241
  %v288 = vpack.c.b16 %v244, %v242
  %v289 = vpack.c.b16 %v247, %v245
  %v290 = vpack.c.b16 %v248, %v246
  %v291 = vpack.c.b16 %v251, %v249
  %v292 = vpack.c.b16 %v252, %v250
  %v293 = vpack.c.b16 %v255, %v253
  %v294 = vpack.c.b16 %v256, %v254
  %v295 = vpack.c.b16 %v259, %v257
  %v296 = vpack.c.b16 %v260, %v258
  %v297 = vpack.c.b16 %v263, %v261
  %v298 = vpack.c.b16 %v264, %v262
  %v299 = vpack.c.b16 %v267, %v265
  %v300 = vpack.c.b16 %v268, %v266
  %v301 = vpack.c.b16 %v271, %v269
  %v302 = vpack.c.b16 %v272, %v270
  %v303 = vpack.c.b16 %v275, %v273
  %v304 = vpack.c.b16 %v276, %v274
  %v305 = vpack.c.b16 %v279, %v277
  %v306 = vpack.c.b16 %v280, %v278
  %v307 = vpack.c.b16 %v283, %v281
  %v308 = vpack.c.b16 %v284, %v282
  %333 = vst [vmem:[#allocation2 + $0xc0] sm:$0xff] %v285
  %334 = vst.msk [vmem:[#allocation2 + $0xc8] sm:$0xff] %vm165, %v286
  %335 = vst [vmem:[#allocation2 + $0xd0] sm:$0xff] %v287
  %336 = vst.msk [vmem:[#allocation2 + $0xd8] sm:$0xff] %vm165, %v288
  %337 = vst [vmem:[#allocation2 + $0xe0] sm:$0xff] %v289
  %338 = vst.msk [vmem:[#allocation2 + $0xe8] sm:$0xff] %vm165, %v290
  %339 = vst [vmem:[#allocation2 + $0xf0] sm:$0xff] %v291
  %340 = vst.msk [vmem:[#allocation2 + $0xf8] sm:$0xff] %vm165, %v292
  %341 = vst [vmem:[#allocation2 + $0x100] sm:$0xff] %v293
  %342 = vst.msk [vmem:[#allocation2 + $0x108] sm:$0xff] %vm165, %v294
  %343 = vst [vmem:[#allocation2 + $0x110] sm:$0xff] %v295
  %344 = vst.msk [vmem:[#allocation2 + $0x118] sm:$0xff] %vm165, %v296
  %345 = vst [vmem:[#allocation2 + $0x120] sm:$0xff] %v297
  %346 = vst.msk [vmem:[#allocation2 + $0x128] sm:$0xff] %vm165, %v298
  %347 = vst [vmem:[#allocation2 + $0x130] sm:$0xff] %v299
  %348 = vst.msk [vmem:[#allocation2 + $0x138] sm:$0xff] %vm165, %v300
  %349 = vst [vmem:[#allocation2 + $0x140] sm:$0xff] %v301
  %350 = vst.msk [vmem:[#allocation2 + $0x148] sm:$0xff] %vm165, %v302
  %351 = vst [vmem:[#allocation2 + $0x150] sm:$0xff] %v303
  %352 = vst.msk [vmem:[#allocation2 + $0x158] sm:$0xff] %vm165, %v304
  %353 = vst [vmem:[#allocation2 + $0x160] sm:$0xff] %v305
  %354 = vst.msk [vmem:[#allocation2 + $0x168] sm:$0xff] %vm165, %v306
  %355 = vst [vmem:[#allocation2 + $0x170] sm:$0xff] %v307
  %356 = vst.msk [vmem:[#allocation2 + $0x178] sm:$0xff] %vm165, %v308
  %v357 = vld [vmem:[%s2] sm:$0xff]
  %v358 = vld [vmem:[%s2 + $0x8] sm:$0xff]
  %v359 = vld [vmem:[%s2 + $0x10] sm:$0xff]
  %v360 = vld [vmem:[%s2 + $0x18] sm:$0xff]
  %v361 = vld [vmem:[%s2 + $0x20] sm:$0xff]
  %v362 = vld [vmem:[%s2 + $0x28] sm:$0xff]
  %v363 = vld [vmem:[%s2 + $0x30] sm:$0xff]
  %v364 = vld [vmem:[%s2 + $0x38] sm:$0xff]
  %v365 = vld [vmem:[%s2 + $0x40] sm:$0xff]
  %v366 = vld [vmem:[%s2 + $0x48] sm:$0xff]
  %v367 = vld [vmem:[%s2 + $0x50] sm:$0xff]
  %v368 = vld [vmem:[%s2 + $0x58] sm:$0xff]
  %v369 = vld [vmem:[%s2 + $0x60] sm:$0xff]
  %v370 = vld [vmem:[%s2 + $0x68] sm:$0xff]
  %v371 = vld [vmem:[%s2 + $0x70] sm:$0xff]
  %v372 = vld [vmem:[%s2 + $0x78] sm:$0xff]
  %v373 = vld [vmem:[%s2 + $0x80] sm:$0xff]
  %v374 = vld [vmem:[%s2 + $0x88] sm:$0xff]
  %v375 = vld [vmem:[%s2 + $0x90] sm:$0xff]
  %v376 = vld [vmem:[%s2 + $0x98] sm:$0xff]
  %v377 = vld [vmem:[%s2 + $0xa0] sm:$0xff]
  %v378 = vld [vmem:[%s2 + $0xa8] sm:$0xff]
  %v379 = vld [vmem:[%s2 + $0xb0] sm:$0xff]
  %v380 = vld [vmem:[%s2 + $0xb8] sm:$0xff]
  %v405 = vunpack.c.l.b16 %v357
  %v406 = vunpack.c.h.b16 %v357
  %v407 = vunpack.c.l.b16 %v358
  %v408 = vunpack.c.h.b16 %v358
  %v409 = vunpack.c.l.b16 %v359
  %v410 = vunpack.c.h.b16 %v359
  %v411 = vunpack.c.l.b16 %v360
  %v412 = vunpack.c.h.b16 %v360
  %v413 = vunpack.c.l.b16 %v361
  %v414 = vunpack.c.h.b16 %v361
  %v415 = vunpack.c.l.b16 %v362
  %v416 = vunpack.c.h.b16 %v362
  %v417 = vunpack.c.l.b16 %v363
  %v418 = vunpack.c.h.b16 %v363
  %v419 = vunpack.c.l.b16 %v364
  %v420 = vunpack.c.h.b16 %v364
  %v421 = vunpack.c.l.b16 %v365
  %v422 = vunpack.c.h.b16 %v365
  %v423 = vunpack.c.l.b16 %v366
  %v424 = vunpack.c.h.b16 %v366
  %v425 = vunpack.c.l.b16 %v367
  %v426 = vunpack.c.h.b16 %v367
  %v427 = vunpack.c.l.b16 %v368
  %v428 = vunpack.c.h.b16 %v368
  %v429 = vunpack.c.l.b16 %v369
  %v430 = vunpack.c.h.b16 %v369
  %v431 = vunpack.c.l.b16 %v370
  %v432 = vunpack.c.h.b16 %v370
  %v433 = vunpack.c.l.b16 %v371
  %v434 = vunpack.c.h.b16 %v371
  %v435 = vunpack.c.l.b16 %v372
  %v436 = vunpack.c.h.b16 %v372
  %v437 = vunpack.c.l.b16 %v373
  %v438 = vunpack.c.h.b16 %v373
  %v439 = vunpack.c.l.b16 %v374
  %v440 = vunpack.c.h.b16 %v374
  %v441 = vunpack.c.l.b16 %v375
  %v442 = vunpack.c.h.b16 %v375
  %v443 = vunpack.c.l.b16 %v376
  %v444 = vunpack.c.h.b16 %v376
  %v445 = vunpack.c.l.b16 %v377
  %v446 = vunpack.c.h.b16 %v377
  %v447 = vunpack.c.l.b16 %v378
  %v448 = vunpack.c.h.b16 %v378
  %v449 = vunpack.c.l.b16 %v379
  %v450 = vunpack.c.h.b16 %v379
  %v451 = vunpack.c.l.b16 %v380
  %v452 = vunpack.c.h.b16 %v380
  %v453 = vpack.c.b16 %v407, %v405
  %v454 = vpack.c.b16 %v408, %v406
  %v455 = vpack.c.b16 %v411, %v409
  %v456 = vpack.c.b16 %v412, %v410
  %v457 = vpack.c.b16 %v415, %v413
  %v458 = vpack.c.b16 %v416, %v414
  %v459 = vpack.c.b16 %v419, %v417
  %v460 = vpack.c.b16 %v420, %v418
  %v461 = vpack.c.b16 %v423, %v421
  %v462 = vpack.c.b16 %v424, %v422
  %v463 = vpack.c.b16 %v427, %v425
  %v464 = vpack.c.b16 %v428, %v426
  %v465 = vpack.c.b16 %v431, %v429
  %v466 = vpack.c.b16 %v432, %v430
  %v467 = vpack.c.b16 %v435, %v433
  %v468 = vpack.c.b16 %v436, %v434
  %v469 = vpack.c.b16 %v439, %v437
  %v470 = vpack.c.b16 %v440, %v438
  %v471 = vpack.c.b16 %v443, %v441
  %v472 = vpack.c.b16 %v444, %v442
  %v473 = vpack.c.b16 %v447, %v445
  %v474 = vpack.c.b16 %v448, %v446
  %v475 = vpack.c.b16 %v451, %v449
  %v476 = vpack.c.b16 %v452, %v450
  %501 = vst [vmem:[#allocation2 + $0x180] sm:$0xff] %v453
  %502 = vst.msk [vmem:[#allocation2 + $0x188] sm:$0xff] %vm165, %v454
  %503 = vst [vmem:[#allocation2 + $0x190] sm:$0xff] %v455
  %504 = vst.msk [vmem:[#allocation2 + $0x198] sm:$0xff] %vm165, %v456
  %505 = vst [vmem:[#allocation2 + $0x1a0] sm:$0xff] %v457
  %506 = vst.msk [vmem:[#allocation2 + $0x1a8] sm:$0xff] %vm165, %v458
  %507 = vst [vmem:[#allocation2 + $0x1b0] sm:$0xff] %v459
  %508 = vst.msk [vmem:[#allocation2 + $0x1b8] sm:$0xff] %vm165, %v460
  %509 = vst [vmem:[#allocation2 + $0x1c0] sm:$0xff] %v461
  %510 = vst.msk [vmem:[#allocation2 + $0x1c8] sm:$0xff] %vm165, %v462
  %511 = vst [vmem:[#allocation2 + $0x1d0] sm:$0xff] %v463
  %512 = vst.msk [vmem:[#allocation2 + $0x1d8] sm:$0xff] %vm165, %v464
  %513 = vst [vmem:[#allocation2 + $0x1e0] sm:$0xff] %v465
  %514 = vst.msk [vmem:[#allocation2 + $0x1e8] sm:$0xff] %vm165, %v466
  %515 = vst [vmem:[#allocation2 + $0x1f0] sm:$0xff] %v467
  %516 = vst.msk [vmem:[#allocation2 + $0x1f8] sm:$0xff] %vm165, %v468
  %517 = vst [vmem:[#allocation2 + $0x200] sm:$0xff] %v469
  %518 = vst.msk [vmem:[#allocation2 + $0x208] sm:$0xff] %vm165, %v470
  %519 = vst [vmem:[#allocation2 + $0x210] sm:$0xff] %v471
  %520 = vst.msk [vmem:[#allocation2 + $0x218] sm:$0xff] %vm165, %v472
  %521 = vst [vmem:[#allocation2 + $0x220] sm:$0xff] %v473
  %522 = vst.msk [vmem:[#allocation2 + $0x228] sm:$0xff] %vm165, %v474
  %523 = vst [vmem:[#allocation2 + $0x230] sm:$0xff] %v475
  %524 = vst.msk [vmem:[#allocation2 + $0x238] sm:$0xff] %vm165, %v476
  %v525 = vld [vmem:[%s3] sm:$0xff]
  %v526 = vld [vmem:[%s3 + $0x8] sm:$0xff]
  %v527 = vld [vmem:[%s3 + $0x10] sm:$0xff]
  %v528 = vld [vmem:[%s3 + $0x18] sm:$0xff]
  %v529 = vld [vmem:[%s3 + $0x20] sm:$0xff]
  %v530 = vld [vmem:[%s3 + $0x28] sm:$0xff]
  %v531 = vld [vmem:[%s3 + $0x30] sm:$0xff]
  %v532 = vld [vmem:[%s3 + $0x38] sm:$0xff]
  %v533 = vld [vmem:[%s3 + $0x40] sm:$0xff]
  %v534 = vld [vmem:[%s3 + $0x48] sm:$0xff]
  %v535 = vld [vmem:[%s3 + $0x50] sm:$0xff]
  %v536 = vld [vmem:[%s3 + $0x58] sm:$0xff]
  %v537 = vld [vmem:[%s3 + $0x60] sm:$0xff]
  %v538 = vld [vmem:[%s3 + $0x68] sm:$0xff]
  %v539 = vld [vmem:[%s3 + $0x70] sm:$0xff]
  %v540 = vld [vmem:[%s3 + $0x78] sm:$0xff]
  %v541 = vld [vmem:[%s3 + $0x80] sm:$0xff]
  %v542 = vld [vmem:[%s3 + $0x88] sm:$0xff]
  %v543 = vld [vmem:[%s3 + $0x90] sm:$0xff]
  %v544 = vld [vmem:[%s3 + $0x98] sm:$0xff]
  %v545 = vld [vmem:[%s3 + $0xa0] sm:$0xff]
  %v546 = vld [vmem:[%s3 + $0xa8] sm:$0xff]
  %v547 = vld [vmem:[%s3 + $0xb0] sm:$0xff]
  %v548 = vld [vmem:[%s3 + $0xb8] sm:$0xff]
  %v573 = vunpack.c.l.b16 %v525
  %v574 = vunpack.c.h.b16 %v525
  %v575 = vunpack.c.l.b16 %v526
  %v576 = vunpack.c.h.b16 %v526
  %v577 = vunpack.c.l.b16 %v527
  %v578 = vunpack.c.h.b16 %v527
  %v579 = vunpack.c.l.b16 %v528
  %v580 = vunpack.c.h.b16 %v528
  %v581 = vunpack.c.l.b16 %v529
  %v582 = vunpack.c.h.b16 %v529
  %v583 = vunpack.c.l.b16 %v530
  %v584 = vunpack.c.h.b16 %v530
  %v585 = vunpack.c.l.b16 %v531
  %v586 = vunpack.c.h.b16 %v531
  %v587 = vunpack.c.l.b16 %v532
  %v588 = vunpack.c.h.b16 %v532
  %v589 = vunpack.c.l.b16 %v533
  %v590 = vunpack.c.h.b16 %v533
  %v591 = vunpack.c.l.b16 %v534
  %v592 = vunpack.c.h.b16 %v534
  %v593 = vunpack.c.l.b16 %v535
  %v594 = vunpack.c.h.b16 %v535
  %v595 = vunpack.c.l.b16 %v536
  %v596 = vunpack.c.h.b16 %v536
  %v597 = vunpack.c.l.b16 %v537
  %v598 = vunpack.c.h.b16 %v537
  %v599 = vunpack.c.l.b16 %v538
  %v600 = vunpack.c.h.b16 %v538
  %v601 = vunpack.c.l.b16 %v539
  %v602 = vunpack.c.h.b16 %v539
  %v603 = vunpack.c.l.b16 %v540
  %v604 = vunpack.c.h.b16 %v540
  %v605 = vunpack.c.l.b16 %v541
  %v606 = vunpack.c.h.b16 %v541
  %v607 = vunpack.c.l.b16 %v542
  %v608 = vunpack.c.h.b16 %v542
  %v609 = vunpack.c.l.b16 %v543
  %v610 = vunpack.c.h.b16 %v543
  %v611 = vunpack.c.l.b16 %v544
  %v612 = vunpack.c.h.b16 %v544
  %v613 = vunpack.c.l.b16 %v545
  %v614 = vunpack.c.h.b16 %v545
  %v615 = vunpack.c.l.b16 %v546
  %v616 = vunpack.c.h.b16 %v546
  %v617 = vunpack.c.l.b16 %v547
  %v618 = vunpack.c.h.b16 %v547
  %v619 = vunpack.c.l.b16 %v548
  %v620 = vunpack.c.h.b16 %v548
  %v621 = vpack.c.b16 %v575, %v573
  %v622 = vpack.c.b16 %v576, %v574
  %v623 = vpack.c.b16 %v579, %v577
  %v624 = vpack.c.b16 %v580, %v578
  %v625 = vpack.c.b16 %v583, %v581
  %v626 = vpack.c.b16 %v584, %v582
  %v627 = vpack.c.b16 %v587, %v585
  %v628 = vpack.c.b16 %v588, %v586
  %v629 = vpack.c.b16 %v591, %v589
  %v630 = vpack.c.b16 %v592, %v590
  %v631 = vpack.c.b16 %v595, %v593
  %v632 = vpack.c.b16 %v596, %v594
  %v633 = vpack.c.b16 %v599, %v597
  %v634 = vpack.c.b16 %v600, %v598
  %v635 = vpack.c.b16 %v603, %v601
  %v636 = vpack.c.b16 %v604, %v602
  %v637 = vpack.c.b16 %v607, %v605
  %v638 = vpack.c.b16 %v608, %v606
  %v639 = vpack.c.b16 %v611, %v609
  %v640 = vpack.c.b16 %v612, %v610
  %v641 = vpack.c.b16 %v615, %v613
  %v642 = vpack.c.b16 %v616, %v614
  %v643 = vpack.c.b16 %v619, %v617
  %v644 = vpack.c.b16 %v620, %v618
  %669 = vst [vmem:[#allocation2 + $0x240] sm:$0xff] %v621
  %670 = vst.msk [vmem:[#allocation2 + $0x248] sm:$0xff] %vm165, %v622
  %671 = vst [vmem:[#allocation2 + $0x250] sm:$0xff] %v623
  %672 = vst.msk [vmem:[#allocation2 + $0x258] sm:$0xff] %vm165, %v624
  %673 = vst [vmem:[#allocation2 + $0x260] sm:$0xff] %v625
  %674 = vst.msk [vmem:[#allocation2 + $0x268] sm:$0xff] %vm165, %v626
  %675 = vst [vmem:[#allocation2 + $0x270] sm:$0xff] %v627
  %676 = vst.msk [vmem:[#allocation2 + $0x278] sm:$0xff] %vm165, %v628
  %677 = vst [vmem:[#allocation2 + $0x280] sm:$0xff] %v629
  %678 = vst.msk [vmem:[#allocation2 + $0x288] sm:$0xff] %vm165, %v630
  %679 = vst [vmem:[#allocation2 + $0x290] sm:$0xff] %v631
  %680 = vst.msk [vmem:[#allocation2 + $0x298] sm:$0xff] %vm165, %v632
  %681 = vst [vmem:[#allocation2 + $0x2a0] sm:$0xff] %v633
  %682 = vst.msk [vmem:[#allocation2 + $0x2a8] sm:$0xff] %vm165, %v634
  %683 = vst [vmem:[#allocation2 + $0x2b0] sm:$0xff] %v635
  %684 = vst.msk [vmem:[#allocation2 + $0x2b8] sm:$0xff] %vm165, %v636
  %685 = vst [vmem:[#allocation2 + $0x2c0] sm:$0xff] %v637
  %686 = vst.msk [vmem:[#allocation2 + $0x2c8] sm:$0xff] %vm165, %v638
  %687 = vst [vmem:[#allocation2 + $0x2d0] sm:$0xff] %v639
  %688 = vst.msk [vmem:[#allocation2 + $0x2d8] sm:$0xff] %vm165, %v640
  %689 = vst [vmem:[#allocation2 + $0x2e0] sm:$0xff] %v641
  %690 = vst.msk [vmem:[#allocation2 + $0x2e8] sm:$0xff] %vm165, %v642
  %691 = vst [vmem:[#allocation2 + $0x2f0] sm:$0xff] %v643
  %692 = vst.msk [vmem:[#allocation2 + $0x2f8] sm:$0xff] %vm165, %v644
  %v693 = vld [vmem:[%s4] sm:$0xff]
  %v694 = vld [vmem:[%s4 + $0x8] sm:$0xff]
  %v695 = vld [vmem:[%s4 + $0x10] sm:$0xff]
  %v696 = vld [vmem:[%s4 + $0x18] sm:$0xff]
  %v697 = vld [vmem:[%s4 + $0x20] sm:$0xff]
  %v698 = vld [vmem:[%s4 + $0x28] sm:$0xff]
  %v699 = vld [vmem:[%s4 + $0x30] sm:$0xff]
  %v700 = vld [vmem:[%s4 + $0x38] sm:$0xff]
  %v701 = vld [vmem:[%s4 + $0x40] sm:$0xff]
  %v702 = vld [vmem:[%s4 + $0x48] sm:$0xff]
  %v703 = vld [vmem:[%s4 + $0x50] sm:$0xff]
  %v704 = vld [vmem:[%s4 + $0x58] sm:$0xff]
  %v705 = vld [vmem:[%s4 + $0x60] sm:$0xff]
  %v706 = vld [vmem:[%s4 + $0x68] sm:$0xff]
  %v707 = vld [vmem:[%s4 + $0x70] sm:$0xff]
  %v708 = vld [vmem:[%s4 + $0x78] sm:$0xff]
  %v709 = vld [vmem:[%s4 + $0x80] sm:$0xff]
  %v710 = vld [vmem:[%s4 + $0x88] sm:$0xff]
  %v711 = vld [vmem:[%s4 + $0x90] sm:$0xff]
  %v712 = vld [vmem:[%s4 + $0x98] sm:$0xff]
  %v713 = vld [vmem:[%s4 + $0xa0] sm:$0xff]
  %v714 = vld [vmem:[%s4 + $0xa8] sm:$0xff]
  %v715 = vld [vmem:[%s4 + $0xb0] sm:$0xff]
  %v716 = vld [vmem:[%s4 + $0xb8] sm:$0xff]
  %v717 = vld [vmem:[%s4 + $0xc0] sm:$0xff]
  %v718 = vld [vmem:[%s4 + $0xc8] sm:$0xff]
  %v719 = vld [vmem:[%s4 + $0xd0] sm:$0xff]
  %v720 = vld [vmem:[%s4 + $0xd8] sm:$0xff]
  %v721 = vld [vmem:[%s4 + $0xe0] sm:$0xff]
  %v722 = vld [vmem:[%s4 + $0xe8] sm:$0xff]
  %v723 = vld [vmem:[%s4 + $0xf0] sm:$0xff]
  %v724 = vld [vmem:[%s4 + $0xf8] sm:$0xff]
  %v725 = vld [vmem:[%s4 + $0x100] sm:$0xff]
  %v726 = vld [vmem:[%s4 + $0x108] sm:$0xff]
  %v727 = vld [vmem:[%s4 + $0x110] sm:$0xff]
  %v728 = vld [vmem:[%s4 + $0x118] sm:$0xff]
  %v729 = vld [vmem:[%s4 + $0x120] sm:$0xff]
  %v730 = vld [vmem:[%s4 + $0x128] sm:$0xff]
  %v731 = vld [vmem:[%s4 + $0x130] sm:$0xff]
  %v732 = vld [vmem:[%s4 + $0x138] sm:$0xff]
  %v733 = vld [vmem:[%s4 + $0x140] sm:$0xff]
  %v734 = vld [vmem:[%s4 + $0x148] sm:$0xff]
  %v735 = vld [vmem:[%s4 + $0x150] sm:$0xff]
  %v736 = vld [vmem:[%s4 + $0x158] sm:$0xff]
  %v737 = vld [vmem:[%s4 + $0x160] sm:$0xff]
  %v738 = vld [vmem:[%s4 + $0x168] sm:$0xff]
  %v739 = vld [vmem:[%s4 + $0x170] sm:$0xff]
  %v740 = vld [vmem:[%s4 + $0x178] sm:$0xff]
  %v741 = vld [vmem:[%s4 + $0x180] sm:$0xff]
  %v742 = vld [vmem:[%s4 + $0x188] sm:$0xff]
  %v743 = vld [vmem:[%s4 + $0x190] sm:$0xff]
  %v744 = vld [vmem:[%s4 + $0x198] sm:$0xff]
  %v745 = vld [vmem:[%s4 + $0x1a0] sm:$0xff]
  %v746 = vld [vmem:[%s4 + $0x1a8] sm:$0xff]
  %v747 = vld [vmem:[%s4 + $0x1b0] sm:$0xff]
  %v748 = vld [vmem:[%s4 + $0x1b8] sm:$0xff]
  %v749 = vld [vmem:[%s4 + $0x1c0] sm:$0xff]
  %v750 = vld [vmem:[%s4 + $0x1c8] sm:$0xff]
  %v751 = vld [vmem:[%s4 + $0x1d0] sm:$0xff]
  %v752 = vld [vmem:[%s4 + $0x1d8] sm:$0xff]
  %v753 = vld [vmem:[%s4 + $0x1e0] sm:$0xff]
  %v754 = vld [vmem:[%s4 + $0x1e8] sm:$0xff]
  %v755 = vld [vmem:[%s4 + $0x1f0] sm:$0xff]
  %v756 = vld [vmem:[%s4 + $0x1f8] sm:$0xff]
  %v757 = vld [vmem:[%s4 + $0x200] sm:$0xff]
  %v758 = vld [vmem:[%s4 + $0x208] sm:$0xff]
  %v759 = vld [vmem:[%s4 + $0x210] sm:$0xff]
  %v760 = vld [vmem:[%s4 + $0x218] sm:$0xff]
  %v761 = vld [vmem:[%s4 + $0x220] sm:$0xff]
  %v762 = vld [vmem:[%s4 + $0x228] sm:$0xff]
  %v763 = vld [vmem:[%s4 + $0x230] sm:$0xff]
  %v764 = vld [vmem:[%s4 + $0x238] sm:$0xff]
  %v765 = vld [vmem:[#allocation2] sm:$0xff]
  %v766 = vld [vmem:[#allocation2 + $0x8] sm:$0xff]
  %v767 = vld [vmem:[#allocation2 + $0x10] sm:$0xff]
  %v768 = vld [vmem:[#allocation2 + $0x18] sm:$0xff]
  %v769 = vld [vmem:[#allocation2 + $0x20] sm:$0xff]
  %v770 = vld [vmem:[#allocation2 + $0x28] sm:$0xff]
  %v771 = vld [vmem:[#allocation2 + $0x30] sm:$0xff]
  %v772 = vld [vmem:[#allocation2 + $0x38] sm:$0xff]
  %v773 = vld [vmem:[#allocation2 + $0x40] sm:$0xff]
  %v774 = vld [vmem:[#allocation2 + $0x48] sm:$0xff]
  %v775 = vld [vmem:[#allocation2 + $0x50] sm:$0xff]
  %v776 = vld [vmem:[#allocation2 + $0x58] sm:$0xff]
  %v777 = vld [vmem:[#allocation2 + $0x60] sm:$0xff]
  %v778 = vld [vmem:[#allocation2 + $0x68] sm:$0xff]
  %v779 = vld [vmem:[#allocation2 + $0x70] sm:$0xff]
  %v780 = vld [vmem:[#allocation2 + $0x78] sm:$0xff]
  %v781 = vld [vmem:[#allocation2 + $0x80] sm:$0xff]
  %v782 = vld [vmem:[#allocation2 + $0x88] sm:$0xff]
  %v783 = vld [vmem:[#allocation2 + $0x90] sm:$0xff]
  %v784 = vld [vmem:[#allocation2 + $0x98] sm:$0xff]
  %v785 = vld [vmem:[#allocation2 + $0xa0] sm:$0xff]
  %v786 = vld [vmem:[#allocation2 + $0xa8] sm:$0xff]
  %v787 = vld [vmem:[#allocation2 + $0xb0] sm:$0xff]
  %v788 = vld [vmem:[#allocation2 + $0xb8] sm:$0xff]
  %v789 = vld [vmem:[#allocation2 + $0xc0] sm:$0xff]
  %v790 = vld [vmem:[#allocation2 + $0xc8] sm:$0xff]
  %v791 = vld [vmem:[#allocation2 + $0xd0] sm:$0xff]
  %v792 = vld [vmem:[#allocation2 + $0xd8] sm:$0xff]
  %v793 = vld [vmem:[#allocation2 + $0xe0] sm:$0xff]
  %v794 = vld [vmem:[#allocation2 + $0xe8] sm:$0xff]
  %v795 = vld [vmem:[#allocation2 + $0xf0] sm:$0xff]
  %v796 = vld [vmem:[#allocation2 + $0xf8] sm:$0xff]
  %v797 = vld [vmem:[#allocation2 + $0x100] sm:$0xff]
  %v798 = vld [vmem:[#allocation2 + $0x108] sm:$0xff]
  %v799 = vld [vmem:[#allocation2 + $0x110] sm:$0xff]
  %v800 = vld [vmem:[#allocation2 + $0x118] sm:$0xff]
  %v801 = vld [vmem:[#allocation2 + $0x120] sm:$0xff]
  %v802 = vld [vmem:[#allocation2 + $0x128] sm:$0xff]
  %v803 = vld [vmem:[#allocation2 + $0x130] sm:$0xff]
  %v804 = vld [vmem:[#allocation2 + $0x138] sm:$0xff]
  %v805 = vld [vmem:[#allocation2 + $0x140] sm:$0xff]
  %v806 = vld [vmem:[#allocation2 + $0x148] sm:$0xff]
  %v807 = vld [vmem:[#allocation2 + $0x150] sm:$0xff]
  %v808 = vld [vmem:[#allocation2 + $0x158] sm:$0xff]
  %v809 = vld [vmem:[#allocation2 + $0x160] sm:$0xff]
  %v810 = vld [vmem:[#allocation2 + $0x168] sm:$0xff]
  %v811 = vld [vmem:[#allocation2 + $0x170] sm:$0xff]
  %v812 = vld [vmem:[#allocation2 + $0x178] sm:$0xff]
  %v813 = vld [vmem:[#allocation2 + $0x180] sm:$0xff]
  %v814 = vld [vmem:[#allocation2 + $0x188] sm:$0xff]
  %v815 = vld [vmem:[#allocation2 + $0x190] sm:$0xff]
  %v816 = vld [vmem:[#allocation2 + $0x198] sm:$0xff]
  %v817 = vld [vmem:[#allocation2 + $0x1a0] sm:$0xff]
  %v818 = vld [vmem:[#allocation2 + $0x1a8] sm:$0xff]
  %v819 = vld [vmem:[#allocation2 + $0x1b0] sm:$0xff]
  %v820 = vld [vmem:[#allocation2 + $0x1b8] sm:$0xff]
  %v821 = vld [vmem:[#allocation2 + $0x1c0] sm:$0xff]
  %v822 = vld [vmem:[#allocation2 + $0x1c8] sm:$0xff]
  %v823 = vld [vmem:[#allocation2 + $0x1d0] sm:$0xff]
  %v824 = vld [vmem:[#allocation2 + $0x1d8] sm:$0xff]
  %v825 = vld [vmem:[#allocation2 + $0x1e0] sm:$0xff]
  %v826 = vld [vmem:[#allocation2 + $0x1e8] sm:$0xff]
  %v827 = vld [vmem:[#allocation2 + $0x1f0] sm:$0xff]
  %v828 = vld [vmem:[#allocation2 + $0x1f8] sm:$0xff]
  %v829 = vld [vmem:[#allocation2 + $0x200] sm:$0xff]
  %v830 = vld [vmem:[#allocation2 + $0x208] sm:$0xff]
  %v831 = vld [vmem:[#allocation2 + $0x210] sm:$0xff]
  %v832 = vld [vmem:[#allocation2 + $0x218] sm:$0xff]
  %v833 = vld [vmem:[#allocation2 + $0x220] sm:$0xff]
  %v834 = vld [vmem:[#allocation2 + $0x228] sm:$0xff]
  %v835 = vld [vmem:[#allocation2 + $0x230] sm:$0xff]
  %v836 = vld [vmem:[#allocation2 + $0x238] sm:$0xff]
  %v837 = vld [vmem:[#allocation2 + $0x240] sm:$0xff]
  %v838 = vld [vmem:[#allocation2 + $0x248] sm:$0xff]
  %v839 = vld [vmem:[#allocation2 + $0x250] sm:$0xff]
  %v840 = vld [vmem:[#allocation2 + $0x258] sm:$0xff]
  %v841 = vld [vmem:[#allocation2 + $0x260] sm:$0xff]
  %v842 = vld [vmem:[#allocation2 + $0x268] sm:$0xff]
  %v843 = vld [vmem:[#allocation2 + $0x270] sm:$0xff]
  %v844 = vld [vmem:[#allocation2 + $0x278] sm:$0xff]
  %v845 = vld [vmem:[#allocation2 + $0x280] sm:$0xff]
  %v846 = vld [vmem:[#allocation2 + $0x288] sm:$0xff]
  %v847 = vld [vmem:[#allocation2 + $0x290] sm:$0xff]
  %v848 = vld [vmem:[#allocation2 + $0x298] sm:$0xff]
  %v849 = vld [vmem:[#allocation2 + $0x2a0] sm:$0xff]
  %v850 = vld [vmem:[#allocation2 + $0x2a8] sm:$0xff]
  %v851 = vld [vmem:[#allocation2 + $0x2b0] sm:$0xff]
  %v852 = vld [vmem:[#allocation2 + $0x2b8] sm:$0xff]
  %v853 = vld [vmem:[#allocation2 + $0x2c0] sm:$0xff]
  %v854 = vld [vmem:[#allocation2 + $0x2c8] sm:$0xff]
  %v855 = vld [vmem:[#allocation2 + $0x2d0] sm:$0xff]
  %v856 = vld [vmem:[#allocation2 + $0x2d8] sm:$0xff]
  %v857 = vld [vmem:[#allocation2 + $0x2e0] sm:$0xff]
  %v858 = vld [vmem:[#allocation2 + $0x2e8] sm:$0xff]
  %v859 = vld [vmem:[#allocation2 + $0x2f0] sm:$0xff]
  %v860 = vld [vmem:[#allocation2 + $0x2f8] sm:$0xff]
  %v933 = vunpack.c.l.b16 %v693
  %v934 = vunpack.c.h.b16 %v693
  %v935 = vunpack.c.l.b16 %v694
  %v936 = vunpack.c.h.b16 %v694
  %v937 = vunpack.c.l.b16 %v695
  %v938 = vunpack.c.h.b16 %v695
  %v939 = vunpack.c.l.b16 %v696
  %v940 = vunpack.c.h.b16 %v696
  %v941 = vunpack.c.l.b16 %v697
  %v942 = vunpack.c.h.b16 %v697
  %v943 = vunpack.c.l.b16 %v698
  %v944 = vunpack.c.h.b16 %v698
  %v945 = vunpack.c.l.b16 %v699
  %v946 = vunpack.c.h.b16 %v699
  %v947 = vunpack.c.l.b16 %v700
  %v948 = vunpack.c.h.b16 %v700
  %v949 = vunpack.c.l.b16 %v701
  %v950 = vunpack.c.h.b16 %v701
  %v951 = vunpack.c.l.b16 %v702
  %v952 = vunpack.c.h.b16 %v702
  %v953 = vunpack.c.l.b16 %v703
  %v954 = vunpack.c.h.b16 %v703
  %v955 = vunpack.c.l.b16 %v704
  %v956 = vunpack.c.h.b16 %v704
  %v957 = vunpack.c.l.b16 %v705
  %v958 = vunpack.c.h.b16 %v705
  %v959 = vunpack.c.l.b16 %v706
  %v960 = vunpack.c.h.b16 %v706
  %v961 = vunpack.c.l.b16 %v707
  %v962 = vunpack.c.h.b16 %v707
  %v963 = vunpack.c.l.b16 %v708
  %v964 = vunpack.c.h.b16 %v708
  %v965 = vunpack.c.l.b16 %v709
  %v966 = vunpack.c.h.b16 %v709
  %v967 = vunpack.c.l.b16 %v710
  %v968 = vunpack.c.h.b16 %v710
  %v969 = vunpack.c.l.b16 %v711
  %v970 = vunpack.c.h.b16 %v711
  %v971 = vunpack.c.l.b16 %v712
  %v972 = vunpack.c.h.b16 %v712
  %v973 = vunpack.c.l.b16 %v713
  %v974 = vunpack.c.h.b16 %v713
  %v975 = vunpack.c.l.b16 %v714
  %v976 = vunpack.c.h.b16 %v714
  %v977 = vunpack.c.l.b16 %v715
  %v978 = vunpack.c.h.b16 %v715
  %v979 = vunpack.c.l.b16 %v716
  %v980 = vunpack.c.h.b16 %v716
  %v981 = vunpack.c.l.b16 %v717
  %v982 = vunpack.c.h.b16 %v717
  %v983 = vunpack.c.l.b16 %v718
  %v984 = vunpack.c.h.b16 %v718
  %v985 = vunpack.c.l.b16 %v719
  %v986 = vunpack.c.h.b16 %v719
  %v987 = vunpack.c.l.b16 %v720
  %v988 = vunpack.c.h.b16 %v720
  %v989 = vunpack.c.l.b16 %v721
  %v990 = vunpack.c.h.b16 %v721
  %v991 = vunpack.c.l.b16 %v722
  %v992 = vunpack.c.h.b16 %v722
  %v993 = vunpack.c.l.b16 %v723
  %v994 = vunpack.c.h.b16 %v723
  %v995 = vunpack.c.l.b16 %v724
  %v996 = vunpack.c.h.b16 %v724
  %v997 = vunpack.c.l.b16 %v725
  %v998 = vunpack.c.h.b16 %v725
  %v999 = vunpack.c.l.b16 %v726
  %v1000 = vunpack.c.h.b16 %v726
  %v1001 = vunpack.c.l.b16 %v727
  %v1002 = vunpack.c.h.b16 %v727
  %v1003 = vunpack.c.l.b16 %v728
  %v1004 = vunpack.c.h.b16 %v728
  %v1005 = vunpack.c.l.b16 %v729
  %v1006 = vunpack.c.h.b16 %v729
  %v1007 = vunpack.c.l.b16 %v730
  %v1008 = vunpack.c.h.b16 %v730
  %v1009 = vunpack.c.l.b16 %v731
  %v1010 = vunpack.c.h.b16 %v731
  %v1011 = vunpack.c.l.b16 %v732
  %v1012 = vunpack.c.h.b16 %v732
  %v1013 = vunpack.c.l.b16 %v733
  %v1014 = vunpack.c.h.b16 %v733
  %v1015 = vunpack.c.l.b16 %v734
  %v1016 = vunpack.c.h.b16 %v734
  %v1017 = vunpack.c.l.b16 %v735
  %v1018 = vunpack.c.h.b16 %v735
  %v1019 = vunpack.c.l.b16 %v736
  %v1020 = vunpack.c.h.b16 %v736
  %v1021 = vunpack.c.l.b16 %v737
  %v1022 = vunpack.c.h.b16 %v737
  %v1023 = vunpack.c.l.b16 %v738
  %v1024 = vunpack.c.h.b16 %v738
  %v1025 = vunpack.c.l.b16 %v739
  %v1026 = vunpack.c.h.b16 %v739
  %v1027 = vunpack.c.l.b16 %v740
  %v1028 = vunpack.c.h.b16 %v740
  %v1029 = vunpack.c.l.b16 %v741
  %v1030 = vunpack.c.h.b16 %v741
  %v1031 = vunpack.c.l.b16 %v742
  %v1032 = vunpack.c.h.b16 %v742
  %v1033 = vunpack.c.l.b16 %v743
  %v1034 = vunpack.c.h.b16 %v743
  %v1035 = vunpack.c.l.b16 %v744
  %v1036 = vunpack.c.h.b16 %v744
  %v1037 = vunpack.c.l.b16 %v745
  %v1038 = vunpack.c.h.b16 %v745
  %v1039 = vunpack.c.l.b16 %v746
  %v1040 = vunpack.c.h.b16 %v746
  %v1041 = vunpack.c.l.b16 %v747
  %v1042 = vunpack.c.h.b16 %v747
  %v1043 = vunpack.c.l.b16 %v748
  %v1044 = vunpack.c.h.b16 %v748
  %v1045 = vunpack.c.l.b16 %v749
  %v1046 = vunpack.c.h.b16 %v749
  %v1047 = vunpack.c.l.b16 %v750
  %v1048 = vunpack.c.h.b16 %v750
  %v1049 = vunpack.c.l.b16 %v751
  %v1050 = vunpack.c.h.b16 %v751
  %v1051 = vunpack.c.l.b16 %v752
  %v1052 = vunpack.c.h.b16 %v752
  %v1053 = vunpack.c.l.b16 %v753
  %v1054 = vunpack.c.h.b16 %v753
  %v1055 = vunpack.c.l.b16 %v754
  %v1056 = vunpack.c.h.b16 %v754
  %v1057 = vunpack.c.l.b16 %v755
  %v1058 = vunpack.c.h.b16 %v755
  %v1059 = vunpack.c.l.b16 %v756
  %v1060 = vunpack.c.h.b16 %v756
  %v1061 = vunpack.c.l.b16 %v757
  %v1062 = vunpack.c.h.b16 %v757
  %v1063 = vunpack.c.l.b16 %v758
  %v1064 = vunpack.c.h.b16 %v758
  %v1065 = vunpack.c.l.b16 %v759
  %v1066 = vunpack.c.h.b16 %v759
  %v1067 = vunpack.c.l.b16 %v760
  %v1068 = vunpack.c.h.b16 %v760
  %v1069 = vunpack.c.l.b16 %v761
  %v1070 = vunpack.c.h.b16 %v761
  %v1071 = vunpack.c.l.b16 %v762
  %v1072 = vunpack.c.h.b16 %v762
  %v1073 = vunpack.c.l.b16 %v763
  %v1074 = vunpack.c.h.b16 %v763
  %v1075 = vunpack.c.l.b16 %v764
  %v1076 = vunpack.c.h.b16 %v764
  %v1077 = vpack.c.b16 %v939, %v933
  %v1078 = vpack.c.b16 %v940, %v934
  %v1079 = vpack.c.b16 %v941, %v935
  %v1080 = vpack.c.b16 %v942, %v936
  %v1081 = vpack.c.b16 %v943, %v937
  %v1082 = vpack.c.b16 %v944, %v938
  %v1083 = vpack.c.b16 %v951, %v945
  %v1084 = vpack.c.b16 %v952, %v946
  %v1085 = vpack.c.b16 %v953, %v947
  %v1086 = vpack.c.b16 %v954, %v948
  %v1087 = vpack.c.b16 %v955, %v949
  %v1088 = vpack.c.b16 %v956, %v950
  %v1089 = vpack.c.b16 %v963, %v957
  %v1090 = vpack.c.b16 %v964, %v958
  %v1091 = vpack.c.b16 %v965, %v959
  %v1092 = vpack.c.b16 %v966, %v960
  %v1093 = vpack.c.b16 %v967, %v961
  %v1094 = vpack.c.b16 %v968, %v962
  %v1095 = vpack.c.b16 %v975, %v969
  %v1096 = vpack.c.b16 %v976, %v970
  %v1097 = vpack.c.b16 %v977, %v971
  %v1098 = vpack.c.b16 %v978, %v972
  %v1099 = vpack.c.b16 %v979, %v973
  %v1100 = vpack.c.b16 %v980, %v974
  %v1101 = vpack.c.b16 %v987, %v981
  %v1102 = vpack.c.b16 %v988, %v982
  %v1103 = vpack.c.b16 %v989, %v983
  %v1104 = vpack.c.b16 %v990, %v984
  %v1105 = vpack.c.b16 %v991, %v985
  %v1106 = vpack.c.b16 %v992, %v986
  %v1107 = vpack.c.b16 %v999, %v993
  %v1108 = vpack.c.b16 %v1000, %v994
  %v1109 = vpack.c.b16 %v1001, %v995
  %v1110 = vpack.c.b16 %v1002, %v996
  %v1111 = vpack.c.b16 %v1003, %v997
  %v1112 = vpack.c.b16 %v1004, %v998
  %v1113 = vpack.c.b16 %v1011, %v1005
  %v1114 = vpack.c.b16 %v1012, %v1006
  %v1115 = vpack.c.b16 %v1013, %v1007
  %v1116 = vpack.c.b16 %v1014, %v1008
  %v1117 = vpack.c.b16 %v1015, %v1009
  %v1118 = vpack.c.b16 %v1016, %v1010
  %v1119 = vpack.c.b16 %v1023, %v1017
  %v1120 = vpack.c.b16 %v1024, %v1018
  %v1121 = vpack.c.b16 %v1025, %v1019
  %v1122 = vpack.c.b16 %v1026, %v1020
  %v1123 = vpack.c.b16 %v1027, %v1021
  %v1124 = vpack.c.b16 %v1028, %v1022
  %v1125 = vpack.c.b16 %v1035, %v1029
  %v1126 = vpack.c.b16 %v1036, %v1030
  %v1127 = vpack.c.b16 %v1037, %v1031
  %v1128 = vpack.c.b16 %v1038, %v1032
  %v1129 = vpack.c.b16 %v1039, %v1033
  %v1130 = vpack.c.b16 %v1040, %v1034
  %v1131 = vpack.c.b16 %v1047, %v1041
  %v1132 = vpack.c.b16 %v1048, %v1042
  %v1133 = vpack.c.b16 %v1049, %v1043
  %v1134 = vpack.c.b16 %v1050, %v1044
  %v1135 = vpack.c.b16 %v1051, %v1045
  %v1136 = vpack.c.b16 %v1052, %v1046
  %v1137 = vpack.c.b16 %v1059, %v1053
  %v1138 = vpack.c.b16 %v1060, %v1054
  %v1139 = vpack.c.b16 %v1061, %v1055
  %v1140 = vpack.c.b16 %v1062, %v1056
  %v1141 = vpack.c.b16 %v1063, %v1057
  %v1142 = vpack.c.b16 %v1064, %v1058
  %v1143 = vpack.c.b16 %v1071, %v1065
  %v1144 = vpack.c.b16 %v1072, %v1066
  %v1145 = vpack.c.b16 %v1073, %v1067
  %v1146 = vpack.c.b16 %v1074, %v1068
  %v1147 = vpack.c.b16 %v1075, %v1069
  %v1148 = vpack.c.b16 %v1076, %v1070
  %1221 = vmatprep.subr.bf16.mxu0 %v766
  %1222 = vmatpush1.bf16.msra.mxu0 %v765
  %1223 = vmatprep.subr.bf16.mxu0 %v768
  %1224 = vmatpush1.bf16.msra.mxu0 %v767
  %1225 = vmatprep.subr.bf16.mxu0 %v770
  %1226 = vmatpush1.bf16.msra.mxu0 %v769
  %1227 = vmatprep.subr.bf16.mxu0 %v772
  %1228 = vmatpush1.bf16.msra.mxu0 %v771
  %1229 = vmatprep.subr.bf16.mxu0 %v774
  %1230 = vmatpush1.bf16.msra.mxu0 %v773
  %1231 = vmatprep.subr.bf16.mxu0 %v776
  %1232 = vmatpush1.bf16.msra.mxu0 %v775
  %1233 = vmatprep.subr.bf16.mxu0 %v778
  %1234 = vmatpush1.bf16.msra.mxu0 %v777
  %1235 = vmatprep.subr.bf16.mxu0 %v780
  %1236 = vmatpush1.bf16.msra.mxu0 %v779
  %1237 = vmatprep.subr.bf16.mxu0 %v782
  %1238 = vmatpush1.bf16.msra.mxu0 %v781
  %1239 = vmatprep.subr.bf16.mxu0 %v784
  %1240 = vmatpush1.bf16.msra.mxu0 %v783
  %1241 = vmatprep.subr.bf16.mxu0 %v786
  %1242 = vmatpush1.bf16.msra.mxu0 %v785
  %1243 = vmatprep.subr.bf16.mxu0 %v788
  %1244 = vmatpush1.bf16.msra.mxu0 %v787
  %1245 = vmatprep.subr.bf16.mxu0 %v790
  %1246 = vmatpush1.bf16.msra.mxu0 %v789
  %1247 = vmatprep.subr.bf16.mxu0 %v792
  %1248 = vmatpush1.bf16.msra.mxu0 %v791
  %1249 = vmatprep.subr.bf16.mxu0 %v794
  %1250 = vmatpush1.bf16.msra.mxu0 %v793
  %1251 = vmatprep.subr.bf16.mxu0 %v796
  %1252 = vmatpush1.bf16.msra.mxu0 %v795
  %1253 = vmatprep.mubr.bf16.mxu0 %v1078
  %1254 = vmatmul.mubr.bf16.gmra.mrb[0].mxu0 %v1077
  %v1255 = vpop.f32.mrb[0].mxu0
  %v1256 = vadd.f32 0.0, %v1255
  %v1257 = vpop.f32.mrb[0].mxu0
  %v1258 = vadd.f32 0.0, %v1257
  %v1259 = vpop.f32.mrb[0].mxu0
  %v1260 = vadd.f32 0.0, %v1259
  %v1261 = vpop.f32.mrb[0].mxu0
  %v1262 = vadd.f32 0.0, %v1261
  %1263 = vmatprep.mubr.bf16.mxu0 %v1084
  %1264 = vmatmul.mubr.bf16.gmra.mrb[0].mxu0 %v1083
  %v1265 = vpop.f32.mrb[0].mxu0
  %v1266 = vadd.f32 0.0, %v1265
  %v1267 = vpop.f32.mrb[0].mxu0
  %v1268 = vadd.f32 0.0, %v1267
  %v1269 = vpop.f32.mrb[0].mxu0
  %v1270 = vadd.f32 0.0, %v1269
  %v1271 = vpop.f32.mrb[0].mxu0
  %v1272 = vadd.f32 0.0, %v1271
  %1273 = vmatprep.mubr.bf16.mxu0 %v1090
  %1274 = vmatmul.mubr.bf16.gmra.mrb[0].mxu0 %v1089
  %v1275 = vpop.f32.mrb[0].mxu0
  %v1276 = vadd.f32 0.0, %v1275
  %v1277 = vpop.f32.mrb[0].mxu0
  %v1278 = vadd.f32 0.0, %v1277
  %v1279 = vpop.f32.mrb[0].mxu0
  %v1280 = vadd.f32 0.0, %v1279
  %v1281 = vpop.f32.mrb[0].mxu0
  %v1282 = vadd.f32 0.0, %v1281
  %1283 = vmatprep.mubr.bf16.mxu0 %v1096
  %1284 = vmatmul.mubr.bf16.gmra.mrb[0].mxu0 %v1095
  %v1285 = vpop.f32.mrb[0].mxu0
  %v1286 = vadd.f32 0.0, %v1285
  %v1287 = vpop.f32.mrb[0].mxu0
  %v1288 = vadd.f32 0.0, %v1287
  %v1289 = vpop.f32.mrb[0].mxu0
  %v1290 = vadd.f32 0.0, %v1289
  %v1291 = vpop.f32.mrb[0].mxu0
  %v1292 = vadd.f32 0.0, %v1291
  %1293 = vmatprep.mubr.bf16.mxu0 %v1102
  %1294 = vmatmul.mubr.bf16.gmra.mrb[0].mxu0 %v1101
  %v1295 = vpop.f32.mrb[0].mxu0
  %v1296 = vadd.f32 0.0, %v1295
  %v1297 = vpop.f32.mrb[0].mxu0
  %v1298 = vadd.f32 0.0, %v1297
  %v1299 = vpop.f32.mrb[0].mxu0
  %v1300 = vadd.f32 0.0, %v1299
  %v1301 = vpop.f32.mrb[0].mxu0
  %v1302 = vadd.f32 0.0, %v1301
  %1303 = vmatprep.mubr.bf16.mxu0 %v1108
  %1304 = vmatmul.mubr.bf16.gmra.mrb[0].mxu0 %v1107
  %v1305 = vpop.f32.mrb[0].mxu0
  %v1306 = vadd.f32 0.0, %v1305
  %v1307 = vpop.f32.mrb[0].mxu0
  %v1308 = vadd.f32 0.0, %v1307
  %v1309 = vpop.f32.mrb[0].mxu0
  %v1310 = vadd.f32 0.0, %v1309
  %v1311 = vpop.f32.mrb[0].mxu0
  %v1312 = vadd.f32 0.0, %v1311
  %1313 = vmatprep.mubr.bf16.mxu0 %v1114
  %1314 = vmatmul.mubr.bf16.gmra.mrb[0].mxu0 %v1113
  %v1315 = vpop.f32.mrb[0].mxu0
  %v1316 = vadd.f32 0.0, %v1315
  %v1317 = vpop.f32.mrb[0].mxu0
  %v1318 = vadd.f32 0.0, %v1317
  %v1319 = vpop.f32.mrb[0].mxu0
  %v1320 = vadd.f32 0.0, %v1319
  %v1321 = vpop.f32.mrb[0].mxu0
  %v1322 = vadd.f32 0.0, %v1321
  %1323 = vmatprep.mubr.bf16.mxu0 %v1120
  %1324 = vmatmul.mubr.bf16.gmra.mrb[0].mxu0 %v1119
  %v1325 = vpop.f32.mrb[0].mxu0
  %v1326 = vadd.f32 0.0, %v1325
  %v1327 = vpop.f32.mrb[0].mxu0
  %v1328 = vadd.f32 0.0, %v1327
  %v1329 = vpop.f32.mrb[0].mxu0
  %v1330 = vadd.f32 0.0, %v1329
  %v1331 = vpop.f32.mrb[0].mxu0
  %v1332 = vadd.f32 0.0, %v1331
  %1333 = vmatprep.mubr.bf16.mxu0 %v1126
  %1334 = vmatmul.mubr.bf16.gmra.mrb[0].mxu0 %v1125
  %v1335 = vpop.f32.mrb[0].mxu0
  %v1336 = vadd.f32 0.0, %v1335
  %v1337 = vpop.f32.mrb[0].mxu0
  %v1338 = vadd.f32 0.0, %v1337
  %v1339 = vpop.f32.mrb[0].mxu0
  %v1340 = vadd.f32 0.0, %v1339
  %v1341 = vpop.f32.mrb[0].mxu0
  %v1342 = vadd.f32 0.0, %v1341
  %1343 = vmatprep.mubr.bf16.mxu0 %v1132
  %1344 = vmatmul.mubr.bf16.gmra.mrb[0].mxu0 %v1131
  %v1345 = vpop.f32.mrb[0].mxu0
  %v1346 = vadd.f32 0.0, %v1345
  %v1347 = vpop.f32.mrb[0].mxu0
  %v1348 = vadd.f32 0.0, %v1347
  %v1349 = vpop.f32.mrb[0].mxu0
  %v1350 = vadd.f32 0.0, %v1349
  %v1351 = vpop.f32.mrb[0].mxu0
  %v1352 = vadd.f32 0.0, %v1351
  %1353 = vmatprep.mubr.bf16.mxu0 %v1138
  %1354 = vmatmul.mubr.bf16.gmra.mrb[0].mxu0 %v1137
  %v1355 = vpop.f32.mrb[0].mxu0
  %v1356 = vadd.f32 0.0, %v1355
  %v1357 = vpop.f32.mrb[0].mxu0
  %v1358 = vadd.f32 0.0, %v1357
  %v1359 = vpop.f32.mrb[0].mxu0
  %v1360 = vadd.f32 0.0, %v1359
  %v1361 = vpop.f32.mrb[0].mxu0
  %v1362 = vadd.f32 0.0, %v1361
  %1363 = vmatprep.mubr.bf16.mxu0 %v1144
  %1364 = vmatmul.mubr.bf16.gmra.mrb[0].mxu0 %v1143
  %v1365 = vpop.f32.mrb[0].mxu0
  %v1366 = vadd.f32 0.0, %v1365
  %v1367 = vpop.f32.mrb[0].mxu0
  %v1368 = vadd.f32 0.0, %v1367
  %v1369 = vpop.f32.mrb[0].mxu0
  %v1370 = vadd.f32 0.0, %v1369
  %v1371 = vpop.f32.mrb[0].mxu0
  %v1372 = vadd.f32 0.0, %v1371
  %1373 = vdwg.mxu0
  %1374 = vmatprep.subr.bf16.mxu0 %v798
  %1375 = vmatpush1.bf16.msra.mxu0 %v797
  %1376 = vmatprep.subr.bf16.mxu0 %v800
  %1377 = vmatpush1.bf16.msra.mxu0 %v799
  %1378 = vmatprep.subr.bf16.mxu0 %v802
  %1379 = vmatpush1.bf16.msra.mxu0 %v801
  %1380 = vmatprep.subr.bf16.mxu0 %v804
  %1381 = vmatpush1.bf16.msra.mxu0 %v803
  %1382 = vmatprep.subr.bf16.mxu0 %v806
  %1383 = vmatpush1.bf16.msra.mxu0 %v805
  %1384 = vmatprep.subr.bf16.mxu0 %v808
  %1385 = vmatpush1.bf16.msra.mxu0 %v807
  %1386 = vmatprep.subr.bf16.mxu0 %v810
  %1387 = vmatpush1.bf16.msra.mxu0 %v809
  %1388 = vmatprep.subr.bf16.mxu0 %v812
  %1389 = vmatpush1.bf16.msra.mxu0 %v811
  %1390 = vmatprep.subr.bf16.mxu0 %v814
  %1391 = vmatpush1.bf16.msra.mxu0 %v813
  %1392 = vmatprep.subr.bf16.mxu0 %v816
  %1393 = vmatpush1.bf16.msra.mxu0 %v815
  %1394 = vmatprep.subr.bf16.mxu0 %v818
  %1395 = vmatpush1.bf16.msra.mxu0 %v817
  %1396 = vmatprep.subr.bf16.mxu0 %v820
  %1397 = vmatpush1.bf16.msra.mxu0 %v819
  %1398 = vmatprep.subr.bf16.mxu0 %v822
  %1399 = vmatpush1.bf16.msra.mxu0 %v821
  %1400 = vmatprep.subr.bf16.mxu0 %v824
  %1401 = vmatpush1.bf16.msra.mxu0 %v823
  %1402 = vmatprep.subr.bf16.mxu0 %v826
  %1403 = vmatpush1.bf16.msra.mxu0 %v825
  %1404 = vmatprep.subr.bf16.mxu0 %v828
  %1405 = vmatpush1.bf16.msra.mxu0 %v827
  %1406 = vmatprep.mubr.bf16.mxu0 %v1080
  %1407 = vmatmul.mubr.bf16.gmra.mrb[0].mxu0 %v1079
  %v1408 = vpop.f32.mrb[0].mxu0
  %v1409 = vadd.f32 %v1256, %v1408
  %v1410 = vpop.f32.mrb[0].mxu0
  %v1411 = vadd.f32 %v1258, %v1410
  %v1412 = vpop.f32.mrb[0].mxu0
  %v1413 = vadd.f32 %v1260, %v1412
  %v1414 = vpop.f32.mrb[0].mxu0
  %v1415 = vadd.f32 %v1262, %v1414
  %1416 = vmatprep.mubr.bf16.mxu0 %v1086
  %1417 = vmatmul.mubr.bf16.gmra.mrb[0].mxu0 %v1085
  %v1418 = vpop.f32.mrb[0].mxu0
  %v1419 = vadd.f32 %v1266, %v1418
  %v1420 = vpop.f32.mrb[0].mxu0
  %v1421 = vadd.f32 %v1268, %v1420
  %v1422 = vpop.f32.mrb[0].mxu0
  %v1423 = vadd.f32 %v1270, %v1422
  %v1424 = vpop.f32.mrb[0].mxu0
  %v1425 = vadd.f32 %v1272, %v1424
  %1426 = vmatprep.mubr.bf16.mxu0 %v1092
  %1427 = vmatmul.mubr.bf16.gmra.mrb[0].mxu0 %v1091
  %v1428 = vpop.f32.mrb[0].mxu0
  %v1429 = vadd.f32 %v1276, %v1428
  %v1430 = vpop.f32.mrb[0].mxu0
  %v1431 = vadd.f32 %v1278, %v1430
  %v1432 = vpop.f32.mrb[0].mxu0
  %v1433 = vadd.f32 %v1280, %v1432
  %v1434 = vpop.f32.mrb[0].mxu0
  %v1435 = vadd.f32 %v1282, %v1434
  %1436 = vmatprep.mubr.bf16.mxu0 %v1098
  %1437 = vmatmul.mubr.bf16.gmra.mrb[0].mxu0 %v1097
  %v1438 = vpop.f32.mrb[0].mxu0
  %v1439 = vadd.f32 %v1286, %v1438
  %v1440 = vpop.f32.mrb[0].mxu0
  %v1441 = vadd.f32 %v1288, %v1440
  %v1442 = vpop.f32.mrb[0].mxu0
  %v1443 = vadd.f32 %v1290, %v1442
  %v1444 = vpop.f32.mrb[0].mxu0
  %v1445 = vadd.f32 %v1292, %v1444
  %1446 = vmatprep.mubr.bf16.mxu0 %v1104
  %1447 = vmatmul.mubr.bf16.gmra.mrb[0].mxu0 %v1103
  %v1448 = vpop.f32.mrb[0].mxu0
  %v1449 = vadd.f32 %v1296, %v1448
  %v1450 = vpop.f32.mrb[0].mxu0
  %v1451 = vadd.f32 %v1298, %v1450
  %v1452 = vpop.f32.mrb[0].mxu0
  %v1453 = vadd.f32 %v1300, %v1452
  %v1454 = vpop.f32.mrb[0].mxu0
  %v1455 = vadd.f32 %v1302, %v1454
  %1456 = vmatprep.mubr.bf16.mxu0 %v1110
  %1457 = vmatmul.mubr.bf16.gmra.mrb[0].mxu0 %v1109
  %v1458 = vpop.f32.mrb[0].mxu0
  %v1459 = vadd.f32 %v1306, %v1458
  %v1460 = vpop.f32.mrb[0].mxu0
  %v1461 = vadd.f32 %v1308, %v1460
  %v1462 = vpop.f32.mrb[0].mxu0
  %v1463 = vadd.f32 %v1310, %v1462
  %v1464 = vpop.f32.mrb[0].mxu0
  %v1465 = vadd.f32 %v1312, %v1464
  %1466 = vmatprep.mubr.bf16.mxu0 %v1116
  %1467 = vmatmul.mubr.bf16.gmra.mrb[0].mxu0 %v1115
  %v1468 = vpop.f32.mrb[0].mxu0
  %v1469 = vadd.f32 %v1316, %v1468
  %v1470 = vpop.f32.mrb[0].mxu0
  %v1471 = vadd.f32 %v1318, %v1470
  %v1472 = vpop.f32.mrb[0].mxu0
  %v1473 = vadd.f32 %v1320, %v1472
  %v1474 = vpop.f32.mrb[0].mxu0
  %v1475 = vadd.f32 %v1322, %v1474
  %1476 = vmatprep.mubr.bf16.mxu0 %v1122
  %1477 = vmatmul.mubr.bf16.gmra.mrb[0].mxu0 %v1121
  %v1478 = vpop.f32.mrb[0].mxu0
  %v1479 = vadd.f32 %v1326, %v1478
  %v1480 = vpop.f32.mrb[0].mxu0
  %v1481 = vadd.f32 %v1328, %v1480
  %v1482 = vpop.f32.mrb[0].mxu0
  %v1483 = vadd.f32 %v1330, %v1482
  %v1484 = vpop.f32.mrb[0].mxu0
  %v1485 = vadd.f32 %v1332, %v1484
  %1486 = vmatprep.mubr.bf16.mxu0 %v1128
  %1487 = vmatmul.mubr.bf16.gmra.mrb[0].mxu0 %v1127
  %v1488 = vpop.f32.mrb[0].mxu0
  %v1489 = vadd.f32 %v1336, %v1488
  %v1490 = vpop.f32.mrb[0].mxu0
  %v1491 = vadd.f32 %v1338, %v1490
  %v1492 = vpop.f32.mrb[0].mxu0
  %v1493 = vadd.f32 %v1340, %v1492
  %v1494 = vpop.f32.mrb[0].mxu0
  %v1495 = vadd.f32 %v1342, %v1494
  %1496 = vmatprep.mubr.bf16.mxu0 %v1134
  %1497 = vmatmul.mubr.bf16.gmra.mrb[0].mxu0 %v1133
  %v1498 = vpop.f32.mrb[0].mxu0
  %v1499 = vadd.f32 %v1346, %v1498
  %v1500 = vpop.f32.mrb[0].mxu0
  %v1501 = vadd.f32 %v1348, %v1500
  %v1502 = vpop.f32.mrb[0].mxu0
  %v1503 = vadd.f32 %v1350, %v1502
  %v1504 = vpop.f32.mrb[0].mxu0
  %v1505 = vadd.f32 %v1352, %v1504
  %1506 = vmatprep.mubr.bf16.mxu0 %v1140
  %1507 = vmatmul.mubr.bf16.gmra.mrb[0].mxu0 %v1139
  %v1508 = vpop.f32.mrb[0].mxu0
  %v1509 = vadd.f32 %v1356, %v1508
  %v1510 = vpop.f32.mrb[0].mxu0
  %v1511 = vadd.f32 %v1358, %v1510
  %v1512 = vpop.f32.mrb[0].mxu0
  %v1513 = vadd.f32 %v1360, %v1512
  %v1514 = vpop.f32.mrb[0].mxu0
  %v1515 = vadd.f32 %v1362, %v1514
  %1516 = vmatprep.mubr.bf16.mxu0 %v1146
  %1517 = vmatmul.mubr.bf16.gmra.mrb[0].mxu0 %v1145
  %v1518 = vpop.f32.mrb[0].mxu0
  %v1519 = vadd.f32 %v1366, %v1518
  %v1520 = vpop.f32.mrb[0].mxu0
  %v1521 = vadd.f32 %v1368, %v1520
  %v1522 = vpop.f32.mrb[0].mxu0
  %v1523 = vadd.f32 %v1370, %v1522
  %v1524 = vpop.f32.mrb[0].mxu0
  %v1525 = vadd.f32 %v1372, %v1524
  %1526 = vdwg.mxu0
  %1527 = vmatprep.subr.bf16.mxu0 %v830
  %1528 = vmatpush1.bf16.msra.mxu0 %v829
  %1529 = vmatprep.subr.bf16.mxu0 %v832
  %1530 = vmatpush1.bf16.msra.mxu0 %v831
  %1531 = vmatprep.subr.bf16.mxu0 %v834
  %1532 = vmatpush1.bf16.msra.mxu0 %v833
  %1533 = vmatprep.subr.bf16.mxu0 %v836
  %1534 = vmatpush1.bf16.msra.mxu0 %v835
  %1535 = vmatprep.subr.bf16.mxu0 %v838
  %1536 = vmatpush1.bf16.msra.mxu0 %v837
  %1537 = vmatprep.subr.bf16.mxu0 %v840
  %1538 = vmatpush1.bf16.msra.mxu0 %v839
  %1539 = vmatprep.subr.bf16.mxu0 %v842
  %1540 = vmatpush1.bf16.msra.mxu0 %v841
  %1541 = vmatprep.subr.bf16.mxu0 %v844
  %1542 = vmatpush1.bf16.msra.mxu0 %v843
  %1543 = vmatprep.subr.bf16.mxu0 %v846
  %1544 = vmatpush1.bf16.msra.mxu0 %v845
  %1545 = vmatprep.subr.bf16.mxu0 %v848
  %1546 = vmatpush1.bf16.msra.mxu0 %v847
  %1547 = vmatprep.subr.bf16.mxu0 %v850
  %1548 = vmatpush1.bf16.msra.mxu0 %v849
  %1549 = vmatprep.subr.bf16.mxu0 %v852
  %1550 = vmatpush1.bf16.msra.mxu0 %v851
  %1551 = vmatprep.subr.bf16.mxu0 %v854
  %1552 = vmatpush1.bf16.msra.mxu0 %v853
  %1553 = vmatprep.subr.bf16.mxu0 %v856
  %1554 = vmatpush1.bf16.msra.mxu0 %v855
  %1555 = vmatprep.subr.bf16.mxu0 %v858
  %1556 = vmatpush1.bf16.msra.mxu0 %v857
  %1557 = vmatprep.subr.bf16.mxu0 %v860
  %1558 = vmatpush1.bf16.msra.mxu0 %v859
  %1559 = vmatprep.mubr.bf16.mxu0 %v1082
  %1560 = vmatmul.mubr.bf16.gmra.mrb[0].mxu0 %v1081
  %v1561 = vpop.f32.mrb[0].mxu0
  %v1562 = vadd.f32 %v1409, %v1561
  %v1563 = vpop.f32.mrb[0].mxu0
  %v1564 = vadd.f32 %v1411, %v1563
  %v1565 = vpop.f32.mrb[0].mxu0
  %v1566 = vadd.f32 %v1413, %v1565
  %v1567 = vpop.f32.mrb[0].mxu0
  %v1568 = vadd.f32 %v1415, %v1567
  %1569 = vmatprep.mubr.bf16.mxu0 %v1088
  %1570 = vmatmul.mubr.bf16.gmra.mrb[0].mxu0 %v1087
  %v1571 = vpop.f32.mrb[0].mxu0
  %v1572 = vadd.f32 %v1419, %v1571
  %v1573 = vpop.f32.mrb[0].mxu0
  %v1574 = vadd.f32 %v1421, %v1573
  %v1575 = vpop.f32.mrb[0].mxu0
  %v1576 = vadd.f32 %v1423, %v1575
  %v1577 = vpop.f32.mrb[0].mxu0
  %v1578 = vadd.f32 %v1425, %v1577
  %1579 = vmatprep.mubr.bf16.mxu0 %v1094
  %1580 = vmatmul.mubr.bf16.gmra.mrb[0].mxu0 %v1093
  %v1581 = vpop.f32.mrb[0].mxu0
  %v1582 = vadd.f32 %v1429, %v1581
  %v1583 = vpop.f32.mrb[0].mxu0
  %v1584 = vadd.f32 %v1431, %v1583
  %v1585 = vpop.f32.mrb[0].mxu0
  %v1586 = vadd.f32 %v1433, %v1585
  %v1587 = vpop.f32.mrb[0].mxu0
  %v1588 = vadd.f32 %v1435, %v1587
  %1589 = vmatprep.mubr.bf16.mxu0 %v1100
  %1590 = vmatmul.mubr.bf16.gmra.mrb[0].mxu0 %v1099
  %v1591 = vpop.f32.mrb[0].mxu0
  %v1592 = vadd.f32 %v1439, %v1591
  %v1593 = vpop.f32.mrb[0].mxu0
  %v1594 = vadd.f32 %v1441, %v1593
  %v1595 = vpop.f32.mrb[0].mxu0
  %v1596 = vadd.f32 %v1443, %v1595
  %v1597 = vpop.f32.mrb[0].mxu0
  %v1598 = vadd.f32 %v1445, %v1597
  %1599 = vmatprep.mubr.bf16.mxu0 %v1106
  %1600 = vmatmul.mubr.bf16.gmra.mrb[0].mxu0 %v1105
  %v1601 = vpop.f32.mrb[0].mxu0
  %v1602 = vadd.f32 %v1449, %v1601
  %v1603 = vpop.f32.mrb[0].mxu0
  %v1604 = vadd.f32 %v1451, %v1603
  %v1605 = vpop.f32.mrb[0].mxu0
  %v1606 = vadd.f32 %v1453, %v1605
  %v1607 = vpop.f32.mrb[0].mxu0
  %v1608 = vadd.f32 %v1455, %v1607
  %1609 = vmatprep.mubr.bf16.mxu0 %v1112
  %1610 = vmatmul.mubr.bf16.gmra.mrb[0].mxu0 %v1111
  %v1611 = vpop.f32.mrb[0].mxu0
  %v1612 = vadd.f32 %v1459, %v1611
  %v1613 = vpop.f32.mrb[0].mxu0
  %v1614 = vadd.f32 %v1461, %v1613
  %v1615 = vpop.f32.mrb[0].mxu0
  %v1616 = vadd.f32 %v1463, %v1615
  %v1617 = vpop.f32.mrb[0].mxu0
  %v1618 = vadd.f32 %v1465, %v1617
  %1619 = vmatprep.mubr.bf16.mxu0 %v1118
  %1620 = vmatmul.mubr.bf16.gmra.mrb[0].mxu0 %v1117
  %v1621 = vpop.f32.mrb[0].mxu0
  %v1622 = vadd.f32 %v1469, %v1621
  %v1623 = vpop.f32.mrb[0].mxu0
  %v1624 = vadd.f32 %v1471, %v1623
  %v1625 = vpop.f32.mrb[0].mxu0
  %v1626 = vadd.f32 %v1473, %v1625
  %v1627 = vpop.f32.mrb[0].mxu0
  %v1628 = vadd.f32 %v1475, %v1627
  %1629 = vmatprep.mubr.bf16.mxu0 %v1124
  %1630 = vmatmul.mubr.bf16.gmra.mrb[0].mxu0 %v1123
  %v1631 = vpop.f32.mrb[0].mxu0
  %v1632 = vadd.f32 %v1479, %v1631
  %v1633 = vpop.f32.mrb[0].mxu0
  %v1634 = vadd.f32 %v1481, %v1633
  %v1635 = vpop.f32.mrb[0].mxu0
  %v1636 = vadd.f32 %v1483, %v1635
  %v1637 = vpop.f32.mrb[0].mxu0
  %v1638 = vadd.f32 %v1485, %v1637
  %1639 = vmatprep.mubr.bf16.mxu0 %v1130
  %1640 = vmatmul.mubr.bf16.gmra.mrb[0].mxu0 %v1129
  %v1641 = vpop.f32.mrb[0].mxu0
  %v1642 = vadd.f32 %v1489, %v1641
  %v1643 = vpop.f32.mrb[0].mxu0
  %v1644 = vadd.f32 %v1491, %v1643
  %v1645 = vpop.f32.mrb[0].mxu0
  %v1646 = vadd.f32 %v1493, %v1645
  %v1647 = vpop.f32.mrb[0].mxu0
  %v1648 = vadd.f32 %v1495, %v1647
  %1649 = vmatprep.mubr.bf16.mxu0 %v1136
  %1650 = vmatmul.mubr.bf16.gmra.mrb[0].mxu0 %v1135
  %v1651 = vpop.f32.mrb[0].mxu0
  %v1652 = vadd.f32 %v1499, %v1651
  %v1653 = vpop.f32.mrb[0].mxu0
  %v1654 = vadd.f32 %v1501, %v1653
  %v1655 = vpop.f32.mrb[0].mxu0
  %v1656 = vadd.f32 %v1503, %v1655
  %v1657 = vpop.f32.mrb[0].mxu0
  %v1658 = vadd.f32 %v1505, %v1657
  %1659 = vmatprep.mubr.bf16.mxu0 %v1142
  %1660 = vmatmul.mubr.bf16.gmra.mrb[0].mxu0 %v1141
  %v1661 = vpop.f32.mrb[0].mxu0
  %v1662 = vadd.f32 %v1509, %v1661
  %v1663 = vpop.f32.mrb[0].mxu0
  %v1664 = vadd.f32 %v1511, %v1663
  %v1665 = vpop.f32.mrb[0].mxu0
  %v1666 = vadd.f32 %v1513, %v1665
  %v1667 = vpop.f32.mrb[0].mxu0
  %v1668 = vadd.f32 %v1515, %v1667
  %1669 = vmatprep.mubr.bf16.mxu0 %v1148
  %1670 = vmatmul.mubr.bf16.gmra.mrb[0].mxu0 %v1147
  %v1671 = vpop.f32.mrb[0].mxu0
  %v1672 = vadd.f32 %v1519, %v1671
  %v1673 = vpop.f32.mrb[0].mxu0
  %v1674 = vadd.f32 %v1521, %v1673
  %v1675 = vpop.f32.mrb[0].mxu0
  %v1676 = vadd.f32 %v1523, %v1675
  %v1677 = vpop.f32.mrb[0].mxu0
  %v1678 = vadd.f32 %v1525, %v1677
  %1679 = vdwg.mxu0
  %1680 = vst [vmem:[%s5] sm:$0xff] %v1562
  %1681 = vst.msk [vmem:[%s5 + $0x8] sm:$0xff] %vm165, %v1564
  %1682 = vst [vmem:[%s5 + $0x10] sm:$0xff] %v1566
  %1683 = vst.msk [vmem:[%s5 + $0x18] sm:$0xff] %vm165, %v1568
  %1684 = vst [vmem:[%s5 + $0x20] sm:$0xff] %v1572
  %1685 = vst.msk [vmem:[%s5 + $0x28] sm:$0xff] %vm165, %v1574
  %1686 = vst [vmem:[%s5 + $0x30] sm:$0xff] %v1576
  %1687 = vst.msk [vmem:[%s5 + $0x38] sm:$0xff] %vm165, %v1578
  %1688 = vst [vmem:[%s5 + $0x40] sm:$0xff] %v1582
  %1689 = vst.msk [vmem:[%s5 + $0x48] sm:$0xff] %vm165, %v1584
  %1690 = vst [vmem:[%s5 + $0x50] sm:$0xff] %v1586
  %1691 = vst.msk [vmem:[%s5 + $0x58] sm:$0xff] %vm165, %v1588
  %1692 = vst [vmem:[%s5 + $0x60] sm:$0xff] %v1592
  %1693 = vst.msk [vmem:[%s5 + $0x68] sm:$0xff] %vm165, %v1594
  %1694 = vst [vmem:[%s5 + $0x70] sm:$0xff] %v1596
  %1695 = vst.msk [vmem:[%s5 + $0x78] sm:$0xff] %vm165, %v1598
  %1696 = vst [vmem:[%s5 + $0x80] sm:$0xff] %v1602
  %1697 = vst.msk [vmem:[%s5 + $0x88] sm:$0xff] %vm165, %v1604
  %1698 = vst [vmem:[%s5 + $0x90] sm:$0xff] %v1606
  %1699 = vst.msk [vmem:[%s5 + $0x98] sm:$0xff] %vm165, %v1608
  %1700 = vst [vmem:[%s5 + $0xa0] sm:$0xff] %v1612
  %1701 = vst.msk [vmem:[%s5 + $0xa8] sm:$0xff] %vm165, %v1614
  %1702 = vst [vmem:[%s5 + $0xb0] sm:$0xff] %v1616
  %1703 = vst.msk [vmem:[%s5 + $0xb8] sm:$0xff] %vm165, %v1618
  %1704 = vst [vmem:[%s5 + $0xc0] sm:$0xff] %v1622
  %1705 = vst.msk [vmem:[%s5 + $0xc8] sm:$0xff] %vm165, %v1624
  %1706 = vst [vmem:[%s5 + $0xd0] sm:$0xff] %v1626
  %1707 = vst.msk [vmem:[%s5 + $0xd8] sm:$0xff] %vm165, %v1628
  %1708 = vst [vmem:[%s5 + $0xe0] sm:$0xff] %v1632
  %1709 = vst.msk [vmem:[%s5 + $0xe8] sm:$0xff] %vm165, %v1634
  %1710 = vst [vmem:[%s5 + $0xf0] sm:$0xff] %v1636
  %1711 = vst.msk [vmem:[%s5 + $0xf8] sm:$0xff] %vm165, %v1638
  %1712 = vst [vmem:[%s5 + $0x100] sm:$0xff] %v1642
  %1713 = vst.msk [vmem:[%s5 + $0x108] sm:$0xff] %vm165, %v1644
  %1714 = vst [vmem:[%s5 + $0x110] sm:$0xff] %v1646
  %1715 = vst.msk [vmem:[%s5 + $0x118] sm:$0xff] %vm165, %v1648
  %1716 = vst [vmem:[%s5 + $0x120] sm:$0xff] %v1652
  %1717 = vst.msk [vmem:[%s5 + $0x128] sm:$0xff] %vm165, %v1654
  %1718 = vst [vmem:[%s5 + $0x130] sm:$0xff] %v1656
  %1719 = vst.msk [vmem:[%s5 + $0x138] sm:$0xff] %vm165, %v1658
  %1720 = vst [vmem:[%s5 + $0x140] sm:$0xff] %v1662
  %1721 = vst.msk [vmem:[%s5 + $0x148] sm:$0xff] %vm165, %v1664
  %1722 = vst [vmem:[%s5 + $0x150] sm:$0xff] %v1666
  %1723 = vst.msk [vmem:[%s5 + $0x158] sm:$0xff] %vm165, %v1668
  %1724 = vst [vmem:[%s5 + $0x160] sm:$0xff] %v1672
  %1725 = vst.msk [vmem:[%s5 + $0x168] sm:$0xff] %vm165, %v1674
  %1726 = vst [vmem:[%s5 + $0x170] sm:$0xff] %v1676
  %1727 = vst.msk [vmem:[%s5 + $0x178] sm:$0xff] %vm165, %v1678
  // Predicated region
  $region22: #{cat_conv2d.1} parent=0 // pred_check
    _
  $region23: #{cat_conv2d.1} parent=0 // pred_check_branch
    %1729 = sbr.rel (0) target = $region25
  $region24: #{cat_conv2d.1} parent=0 // pred_region
    _
  $region25: #{cat_conv2d.1} parent=0 // pred_fallthru
    _
  // Predicated region
  $region26: #{cat_conv2d.1} parent=0 // pred_check
    _
  $region27: #{cat_conv2d.1} parent=0 // pred_check_branch
    %1731 = sbr.rel (0) target = $region29
  $region28: #{cat_conv2d.1} parent=0 // pred_region
    _
  $region29: #{cat_conv2d.1} parent=0 // pred_fallthru
    _

</llo_original>
